<compile_context>
chip_gen: v6e
topology: v6e:2x2x1
jax: 0.10.0
libtpu: 0.0.40
codegen_flags: <defaults>
</compile_context>

<pallas_src>
import jax
import jax.numpy as jnp
import numpy as np
from jax.experimental import pallas as pl
from jax.experimental.pallas import tpu as pltpu

D_MODEL = 512  # d_model=512 per the module


def _ceil_to(x, m):
    return ((x + m - 1) // m) * m


def _gicon_head_kernel(scale_ref, img_ref, gra_ref, li_ref, lg_ref, gra_n_ref):
    # scale_ref : SMEM (1,) f32 holding exp(logit_scale)
    # img_ref   : VMEM [TB, D]  image CLS tile for grid step i
    # gra_ref   : VMEM [Bp, D]  graph CLS matrix (resident: constant index_map)
    # li_ref    : VMEM [TB, Bp] -> rows [i*TB, (i+1)*TB) of logits_per_image
    # lg_ref    : VMEM [Bp, TB] -> cols [i*TB, (i+1)*TB) of logits_per_graph
    # gra_n_ref : VMEM [Bp, D]  scratch: normalized (mm_dtype) graph features

    # Normalize the resident graph CLS matrix once and cache it (grid axis is
    # "arbitrary" => sequential, so step 0 always runs first).
    @pl.when(pl.program_id(0) == 0)
    def _():
        g = gra_ref[...].astype(jnp.float32)
        gss = jnp.sum(g * g, axis=-1, keepdims=True)
        g_inv = jnp.where(gss > 0, jax.lax.rsqrt(gss), 0.0)  # padded rows -> 0, no NaN
        gra_n_ref[...] = (g * g_inv).astype(gra_n_ref.dtype)

    img = img_ref[...].astype(jnp.float32)
    iss = jnp.sum(img * img, axis=-1, keepdims=True)
    i_inv = jnp.where(iss > 0, jax.lax.rsqrt(iss), 0.0)
    # Fold exp(logit_scale) into the per-row normalization factor of img only:
    # it rides along with the existing [TB,1] rsqrt broadcast, removing the
    # 2*TB*Bp epilogue multiplies on the results.
    img_n = (img * (scale_ref[0] * i_inv)).astype(gra_n_ref.dtype)

    gra_n = gra_n_ref[...]

    # logits_per_image rows i: img_i @ gra.T   (contract feature dim, f32 acc)
    li_ref[...] = jax.lax.dot_general(
        img_n, gra_n,
        dimension_numbers=(((1,), (1,)), ((), ())),
        preferred_element_type=jnp.float32,
    )
    # logits_per_graph cols i: gra @ img_i.T  -- second matmul instead of an
    # XLU transpose; the MXU is nearly idle here so this is ~free.
    lg_ref[...] = jax.lax.dot_general(
        gra_n, img_n,
        dimension_numbers=(((1,), (1,)), ((), ())),
        preferred_element_type=jnp.float32,
    )


def gicon_forward(image_embeddings, graph_embeddings, logit_scale, *, block_b=256):
    """image_embeddings: [B, S_img, D]; graph_embeddings: [B, S_gra, D];
    logit_scale: scalar parameter (pre-exp, as in the PyTorch module)."""
    B, S_img, D = image_embeddings.shape
    Bg, S_gra, Dg = graph_embeddings.shape
    assert B == Bg and D == Dg
    assert D % 128 == 0, "d_model must be lane-aligned (128)"

    # Lane-dense batch padding: Bp is a multiple of 128 so TB and the output
    # last dim are always multiples of 128 (unmasked vst), and MXU-shaped.
    Bp = _ceil_to(B, 128)
    TB = 128
    for cand in (1024, 512, 256):
        if cand <= block_b and Bp % cand == 0:
            TB = cand
            break

    # Keep MXU operands in bf16 when the encoders emit bf16 (halves the
    # resident-slab VMEM footprint, matters on v7x's 64 MiB); f32 otherwise
    # for exact parity with the f32 reference.  f32 accumulation either way.
    mm_dtype = jnp.bfloat16 if image_embeddings.dtype == jnp.bfloat16 else jnp.float32

    if Bp == B:
        # No padding needed: read the CLS features straight out of the token
        # slabs with a strided DMA.  reshape([B, S*D]) is free (row-major) and
        # a (TB, D) block at column-block 0 covers exactly token 0 of each row
        # (D contiguous elements, row stride S*D).  No intermediate [B, D] copy.
        img_in = image_embeddings.reshape(B, S_img * D)
        gra_in = graph_embeddings.reshape(B, S_gra * D)
    else:
        # Ragged-batch remainder path: slice CLS then zero-pad (pads only a
        # [B, D]-sized array, not the full sequence slab).  Padded rows stay
        # exactly zero through the masked rsqrt -> zero logits, sliced away.
        img_in = jnp.pad(image_embeddings[:, 0, :], ((0, Bp - B), (0, 0)))
        gra_in = jnp.pad(graph_embeddings[:, 0, :], ((0, Bp - B), (0, 0)))

    # exp of a single scalar parameter is glue; passed via SMEM.
    scale = jnp.exp(logit_scale).reshape((1,)).astype(jnp.float32)

    # Explicit VMEM budget for the resident-gra design: normalized slab +
    # (double-buffered) raw gra block + img tile + both output blocks.
    in_item = jnp.dtype(image_embeddings.dtype).itemsize
    mm_item = jnp.dtype(mm_dtype).itemsize
    est = (Bp * D * mm_item              # gra_n scratch (resident)
           + 2 * Bp * D * in_item        # raw gra input block buffers
           + 2 * TB * D * in_item        # img tile, double-buffered
           + 2 * 2 * TB * Bp * 4)        # li + lg output blocks, double-buffered
    vmem_limit = int(max(32 << 20, min(est * 5 // 4 + (2 << 20), 100 << 20)))
    # TODO(synk): for very large B (resident slab approaching VMEM) tile the
    # gra axis as well instead of keeping it fully resident (esp. v7x, 64 MiB).

    grid = (Bp // TB,)

    li, lg = pl.pallas_call(
        _gicon_head_kernel,
        out_shape=(
            jax.ShapeDtypeStruct((Bp, Bp), jnp.float32),
            jax.ShapeDtypeStruct((Bp, Bp), jnp.float32),
        ),
        grid=grid,
        in_specs=[
            pl.BlockSpec(memory_space=pltpu.MemorySpace.SMEM),   # exp(logit_scale)
            pl.BlockSpec((TB, D), lambda i: (i, 0)),             # image CLS tile i
            pl.BlockSpec((Bp, D), lambda i: (0, 0)),             # graph CLS (resident)
        ],
        out_specs=[
            pl.BlockSpec((TB, Bp), lambda i: (i, 0)),            # logits_per_image rows
            pl.BlockSpec((Bp, TB), lambda i: (0, i)),            # logits_per_graph cols
        ],
        scratch_shapes=[pltpu.VMEM((Bp, D), mm_dtype)],          # cached normalized gra
        compiler_params=pltpu.CompilerParams(
            # Sequential: grid step 0 fills the gra_n scratch carried by later steps.
            dimension_semantics=("arbitrary",),
            vmem_limit_bytes=vmem_limit,
        ),
    )(scale, img_in, gra_in)

    if Bp != B:
        li = li[:B, :B]
        lg = lg[:B, :B]

    return {"logits_per_image": li, "logits_per_graph": lg}


def _reference(image_embeddings, graph_embeddings, logit_scale):
    img = image_embeddings[:, 0].astype(jnp.float32)
    gra = graph_embeddings[:, 0].astype(jnp.float32)
    img = img / jnp.linalg.norm(img, axis=1, keepdims=True)
    gra = gra / jnp.linalg.norm(gra, axis=1, keepdims=True)
    logits = jnp.exp(logit_scale) * img @ gra.T
    return {"logits_per_image": logits, "logits_per_graph": logits.T}


if __name__ == "__main__":
    # TODO(synk): ImageEncoder / GraphEncoder (backbone + transformer stacks) are
    # not defined in the provided source; their output token embeddings are
    # synthesized deterministically here instead.
    D = D_MODEL
    S_IMG, S_GRA = 16, 8
    logit_scale = jnp.asarray(np.log(1.0 / 0.07), dtype=jnp.float32)

    key = jax.random.PRNGKey(0)
    k1, k2, k3, k4 = jax.random.split(key, 4)

    # Case 1: lane-aligned batch -> strided-CLS DMA path, no padding.
    B1 = 128
    img1 = jax.random.normal(k1, (B1, S_IMG, D), dtype=jnp.float32)
    gra1 = jax.random.normal(k2, (B1, S_GRA, D), dtype=jnp.float32)
    out1 = gicon_forward(img1, gra1, logit_scale)
    jax.block_until_ready(out1)
    ref1 = _reference(img1, gra1, logit_scale)
    np.testing.assert_allclose(np.asarray(out1["logits_per_image"]),
                               np.asarray(ref1["logits_per_image"]),
                               rtol=2e-4, atol=2e-4)
    np.testing.assert_allclose(np.asarray(out1["logits_per_graph"]),
                               np.asarray(ref1["logits_per_graph"]),
                               rtol=2e-4, atol=2e-4)

    # Case 2: small / ragged batch -> padded fallback path.
    B2 = 8
    img2 = jax.random.normal(k3, (B2, S_IMG, D), dtype=jnp.float32)
    gra2 = jax.random.normal(k4, (B2, S_GRA, D), dtype=jnp.float32)
    out2 = gicon_forward(img2, gra2, logit_scale)
    jax.block_until_ready(out2)
    ref2 = _reference(img2, gra2, logit_scale)
    np.testing.assert_allclose(np.asarray(out2["logits_per_image"]),
                               np.asarray(ref2["logits_per_image"]),
                               rtol=2e-4, atol=2e-4)
    np.testing.assert_allclose(np.asarray(out2["logits_per_graph"]),
                               np.asarray(ref2["logits_per_graph"]),
                               rtol=2e-4, atol=2e-4)

    print("KERNEL_OK")
</pallas_src>

<mosaic_0001>
module attributes {stable_mosaic.version = 11 : i64} {
  func.func @_gicon_head_kernel(%arg0: i32, %arg1: memref<1xf32, #tpu.memory_space<smem>>, %arg2: memref<128x512xf32, #tpu.memory_space<vmem>>, %arg3: memref<128x512xf32, #tpu.memory_space<vmem>>, %arg4: memref<128x128xf32, #tpu.memory_space<vmem>>, %arg5: memref<128x128xf32, #tpu.memory_space<vmem>>, %arg6: memref<128x512xf32, #tpu.memory_space<vmem>>) attributes {dimension_semantics = [#tpu.dimension_semantics<arbitrary>], iteration_bounds = array<i64: 1>, scalar_prefetch = 0 : i64, scratch_operands = 1 : i64, tpu.core_type = #tpu.core_type<tc>, window_params = [{transform_indices = @transform_0, window_bounds = array<i64: 1>}, {transform_indices = @transform_1, window_bounds = array<i64: 128, 512>}, {transform_indices = @transform_2, window_bounds = array<i64: 128, 512>}, {transform_indices = @transform_3, window_bounds = array<i64: 128, 128>}, {transform_indices = @transform_4, window_bounds = array<i64: 128, 128>}]} {
    %c0_i32 = arith.constant 0 : i32
    %0 = arith.cmpi eq, %arg0, %c0_i32 : i32
    %1 = arith.extui %0 : i1 to i32
    %c0_i32_0 = arith.constant 0 : i32
    %2 = arith.cmpi ne, %1, %c0_i32_0 : i32
    scf.if %2 {
      %c0_13 = arith.constant 0 : index
      %c0_14 = arith.constant 0 : index
      %22 = vector.load %arg3[%c0_13, %c0_14] : memref<128x512xf32, #tpu.memory_space<vmem>>, vector<128x512xf32>
      %23 = arith.mulf %22, %22 : vector<128x512xf32>
      %cst_15 = arith.constant dense<0.000000e+00> : vector<128xf32>
      %24 = vector.multi_reduction <add>, %23, %cst_15 [1] : vector<128x512xf32> to vector<128xf32>
      %25 = vector.shape_cast %24 : vector<128xf32> to vector<128x1xf32>
      %cst_16 = arith.constant 0.000000e+00 : f32
      %26 = vector.broadcast %cst_16 : f32 to vector<128x1xf32>
      %27 = arith.cmpf ogt, %25, %26 : vector<128x1xf32>
      %28 = math.rsqrt %25 : vector<128x1xf32>
      %cst_17 = arith.constant 0.000000e+00 : f32
      %29 = vector.broadcast %cst_17 : f32 to vector<128x1xf32>
      %30 = arith.select %27, %28, %29 : vector<128x1xi1>, vector<128x1xf32>
      %31 = vector.broadcast %30 : vector<128x1xf32> to vector<128x512xf32>
      %32 = arith.mulf %22, %31 : vector<128x512xf32>
      %c0_18 = arith.constant 0 : index
      %c0_19 = arith.constant 0 : index
      %33 = vector.load %arg6[%c0_18, %c0_19] : memref<128x512xf32, #tpu.memory_space<vmem>>, vector<128x512xf32>
      tpu.vector_store %arg6[%c0_18, %c0_19], %32 {strides = array<i32>} : memref<128x512xf32, #tpu.memory_space<vmem>>, vector<128x512xf32>,
    } else {
    }
    %c0 = arith.constant 0 : index
    %c0_1 = arith.constant 0 : index
    %3 = vector.load %arg2[%c0, %c0_1] : memref<128x512xf32, #tpu.memory_space<vmem>>, vector<128x512xf32>
    %4 = arith.mulf %3, %3 : vector<128x512xf32>
    %cst = arith.constant dense<0.000000e+00> : vector<128xf32>
    %5 = vector.multi_reduction <add>, %4, %cst [1] : vector<128x512xf32> to vector<128xf32>
    %6 = vector.shape_cast %5 : vector<128xf32> to vector<128x1xf32>
    %cst_2 = arith.constant 0.000000e+00 : f32
    %7 = vector.broadcast %cst_2 : f32 to vector<128x1xf32>
    %8 = arith.cmpf ogt, %6, %7 : vector<128x1xf32>
    %9 = math.rsqrt %6 : vector<128x1xf32>
    %cst_3 = arith.constant 0.000000e+00 : f32
    %10 = vector.broadcast %cst_3 : f32 to vector<128x1xf32>
    %11 = arith.select %8, %9, %10 : vector<128x1xi1>, vector<128x1xf32>
    %c0_4 = arith.constant 0 : index
    %12 = memref.load %arg1[%c0_4] : memref<1xf32, #tpu.memory_space<smem>>
    %13 = vector.broadcast %12 : f32 to vector<128x1xf32>
    %14 = arith.mulf %13, %11 : vector<128x1xf32>
    %15 = vector.broadcast %14 : vector<128x1xf32> to vector<128x512xf32>
    %16 = arith.mulf %3, %15 : vector<128x512xf32>
    %c0_5 = arith.constant 0 : index
    %c0_6 = arith.constant 0 : index
    %17 = vector.load %arg6[%c0_5, %c0_6] : memref<128x512xf32, #tpu.memory_space<vmem>>, vector<128x512xf32>
    %cst_7 = arith.constant dense<0.000000e+00> : vector<128x128xf32>
    %18 = tpu.matmul %16, %17, %cst_7 {dimension_numbers = #tpu.dot_dimension_numbers<[1], [1], [0], [0], [0, 0, 1, 0], [], []>} : vector<128x512xf32>, vector<128x512xf32>, vector<128x128xf32> -> vector<128x128xf32>
    %c0_8 = arith.constant 0 : index
    %c0_9 = arith.constant 0 : index
    %19 = vector.load %arg4[%c0_8, %c0_9] : memref<128x128xf32, #tpu.memory_space<vmem>>, vector<128x128xf32>
    tpu.vector_store %arg4[%c0_8, %c0_9], %18 {strides = array<i32>} : memref<128x128xf32, #tpu.memory_space<vmem>>, vector<128x128xf32>,
    %cst_10 = arith.constant dense<0.000000e+00> : vector<128x128xf32>
    %20 = tpu.matmul %17, %16, %cst_10 {dimension_numbers = #tpu.dot_dimension_numbers<[1], [1], [0], [0], [0, 0, 1, 0], [], []>} : vector<128x512xf32>, vector<128x512xf32>, vector<128x128xf32> -> vector<128x128xf32>
    %c0_11 = arith.constant 0 : index
    %c0_12 = arith.constant 0 : index
    %21 = vector.load %arg5[%c0_11, %c0_12] : memref<128x128xf32, #tpu.memory_space<vmem>>, vector<128x128xf32>
    tpu.vector_store %arg5[%c0_11, %c0_12], %20 {strides = array<i32>} : memref<128x128xf32, #tpu.memory_space<vmem>>, vector<128x128xf32>,
    return
  }
  func.func @transform_0(%arg0: i32) -> i32 {
    %c0_i32 = arith.constant 0 : i32
    %c0_i32_0 = arith.constant 0 : i32
    return %c0_i32 : i32
  }
  func.func @transform_1(%arg0: i32) -> (i32, i32) {
    %c0_i32 = arith.constant 0 : i32
    %c0_i32_0 = arith.constant 0 : i32
    return %arg0, %c0_i32 : i32, i32
  }
  func.func @transform_2(%arg0: i32) -> (i32, i32) {
    %c0_i32 = arith.constant 0 : i32
    %c0_i32_0 = arith.constant 0 : i32
    %c0_i32_1 = arith.constant 0 : i32
    return %c0_i32, %c0_i32_0 : i32, i32
  }
  func.func @transform_3(%arg0: i32) -> (i32, i32) {
    %c0_i32 = arith.constant 0 : i32
    %c0_i32_0 = arith.constant 0 : i32
    return %arg0, %c0_i32 : i32, i32
  }
  func.func @transform_4(%arg0: i32) -> (i32, i32) {
    %c0_i32 = arith.constant 0 : i32
    %c0_i32_0 = arith.constant 0 : i32
    return %c0_i32, %arg0 : i32, i32
  }
}

</mosaic_0001>

<llo_original>
// kernel: tpu_custom_call.1
$region0: #{tpu_custom_call.1}
  #allocation0 [shape = 'u32[]', space=smem, size = 0x4, offset = 0x4, fixed_abs, tag = 'smem constant byte address 0x4 - core index']
  #allocation1 [shape = 'u32[144,128]{1,0:T(1,128)}', space=vmem, size = 0x12000, scoped, tag = 'internal scratch']
  #allocation2 [shape = 'f32[128,512]{1,0:T(8,128)}', space=vmem, size = 0x40000, scoped, tag = 'scratch operand']
  #allocation3 [shape = 'f32[1]{0:T(128)S(6)}', space=smem, size = 0x200, scoped, tag = 'scoped memory for tpu_custom_call.1']
  %s0 = inlined_call_operand.<no memory space> [shape: f32[1], index: 0, kind: input, shape index: {}]
  %s1 = inlined_call_operand.hbm [shape: f32[128,8192], index: 1, kind: input, shape index: {}]
  %s2 = inlined_call_operand.hbm [shape: f32[128,4096], index: 2, kind: input, shape index: {}]
  %s3 = inlined_call_operand.hbm [shape: f32[128,128], index: 3, kind: output, shape index: {0}]
  %s4 = inlined_call_operand.hbm [shape: f32[128,128], index: 4, kind: output, shape index: {1}]
  %5 = xla_tuple %s3, %s4
  %s6 = sld [smem:[#allocation0]]
  $region42: #{tpu_custom_call.1} parent=0
    _
  %s8 = ssub.s32 1, %s6
  %s9 = scalar_select 0, %s8, %s6
  %10 = sst [smem:[#allocation3]] %s0
  $region1: #{tpu_custom_call.1} parent=0
    #allocation4 [shape = 'u8[262144]{0}', space=vmem, size = 0x40000, scoped, tag = 'input window, operand 1, single buffered']
    #allocation5 [shape = 's32[1]{0}', space=sflag, size = 0x4, scoped, tag = 'scoped memory for tpu_custom_call.1']
    #allocation6 [shape = 's32[1]{0}', space=sflag, size = 0x4, scoped, tag = 'scoped memory for tpu_custom_call.1']
    #allocation7 [shape = 'u8[262144]{0}', space=vmem, size = 0x40000, scoped, tag = 'input window, operand 2, single buffered']
    #allocation8 [shape = 's32[1]{0}', space=sflag, size = 0x4, scoped, tag = 'scoped memory for tpu_custom_call.1']
    #allocation9 [shape = 'u8[65536]{0}', space=vmem, size = 0x10000, scoped, tag = 'output window, operand 0, single buffered']
    #allocation10 [shape = 'u8[65536]{0}', space=vmem, size = 0x10000, scoped, tag = 'output window, operand 1, single buffered']
    #allocation11 [shape = 's32[1]{0}', space=sflag, size = 0x4, scoped, tag = 'scoped memory for tpu_custom_call.1']
    %11 = vsyncpa [#allocation5], 0
    %12 = vsyncpa [#allocation8], 0
    %13 = vsyncpa [#allocation6], 0
    %14 = vsyncpa [#allocation11], 0
    // Predicated region
    $region2: #{tpu_custom_call.1} parent=1 // pred_check
      _
    $region3: #{tpu_custom_call.1} parent=1 // pred_check_branch
      %16 = sbr.rel (0) target = $region5
    $region4: #{tpu_custom_call.1} parent=1 // pred_region
      _
    $region5: #{tpu_custom_call.1} parent=1 // pred_fallthru
      _
    // Predicated region
    $region6: #{tpu_custom_call.1} parent=1 // pred_check
      _
    $region7: #{tpu_custom_call.1} parent=1 // pred_check_branch
      %18 = sbr.rel (0) target = $region9
    $region8: #{tpu_custom_call.1} parent=1 // pred_region
      %s20 = ssub.s32 8192, 8192
      %21 = vsyncadd [#allocation5], %s20
      %s22 = sshll.u32 [#allocation4], 4
      %s23 = int_to_ptr.vmem [resolvable:$true] %s22
      %28 = dma.hbm_to_vmem [thread:$0]  %s1, 8192, %s23, [#allocation5], 8192, 512, 32
    $region9: #{tpu_custom_call.1} parent=1 // pred_fallthru
      _
    // Predicated region
    $region10: #{tpu_custom_call.1} parent=1 // pred_check
      _
    $region11: #{tpu_custom_call.1} parent=1 // pred_check_branch
      %30 = sbr.rel (0) target = $region13
    $region12: #{tpu_custom_call.1} parent=1 // pred_region
      %s32 = ssub.s32 8192, 8192
      %33 = vsyncadd [#allocation8], %s32
      %s34 = sshll.u32 [#allocation7], 4
      %s35 = int_to_ptr.vmem [resolvable:$true] %s34
      %40 = dma.hbm_to_vmem [thread:$0]  %s2, 8192, %s35, [#allocation8], 4096, 512, 32
    $region13: #{tpu_custom_call.1} parent=1 // pred_fallthru
      _
    // Predicated region
    $region14: #{tpu_custom_call.1} parent=1 // pred_check
      _
    $region15: #{tpu_custom_call.1} parent=1 // pred_check_branch
      %42 = sbr.rel (0) target = $region17
    $region16: #{tpu_custom_call.1} parent=1 // pred_region
      %43 = dma.done [#allocation5], 8192
    $region17: #{tpu_custom_call.1} parent=1 // pred_fallthru
      _
    // Predicated region
    $region18: #{tpu_custom_call.1} parent=1 // pred_check
      _
    $region19: #{tpu_custom_call.1} parent=1 // pred_check_branch
      %45 = sbr.rel (0) target = $region21
    $region20: #{tpu_custom_call.1} parent=1 // pred_region
      %46 = dma.done [#allocation8], 8192
    $region21: #{tpu_custom_call.1} parent=1 // pred_fallthru
      _
    %p47 = scmp.eq.s32.totalorder 0, 0
    // Predicated region
    $region22: #{tpu_custom_call.1} parent=1 // pred_check
      %p48 = pneg %p47
    $region23: #{tpu_custom_call.1} parent=1 // pred_check_branch
      %50 = sbr.rel (%p48) target = $region25
    $region24: #{tpu_custom_call.1} parent=1 // pred_region
      %v51 = vld [vmem:[#allocation7] sm:$0xff]
      %v52 = vld [vmem:[#allocation7 + $0x8] sm:$0xff]
      %v53 = vld [vmem:[#allocation7 + $0x10] sm:$0xff]
      %v54 = vld [vmem:[#allocation7 + $0x18] sm:$0xff]
      %v55 = vld [vmem:[#allocation7 + $0x20] sm:$0xff]
      %v56 = vld [vmem:[#allocation7 + $0x28] sm:$0xff]
      %v57 = vld [vmem:[#allocation7 + $0x30] sm:$0xff]
      %v58 = vld [vmem:[#allocation7 + $0x38] sm:$0xff]
      %v59 = vld [vmem:[#allocation7 + $0x40] sm:$0xff]
      %v60 = vld [vmem:[#allocation7 + $0x48] sm:$0xff]
      %v61 = vld [vmem:[#allocation7 + $0x50] sm:$0xff]
      %v62 = vld [vmem:[#allocation7 + $0x58] sm:$0xff]
      %v63 = vld [vmem:[#allocation7 + $0x60] sm:$0xff]
      %v64 = vld [vmem:[#allocation7 + $0x68] sm:$0xff]
      %v65 = vld [vmem:[#allocation7 + $0x70] sm:$0xff]
      %v66 = vld [vmem:[#allocation7 + $0x78] sm:$0xff]
      %v67 = vld [vmem:[#allocation7 + $0x80] sm:$0xff]
      %v68 = vld [vmem:[#allocation7 + $0x88] sm:$0xff]
      %v69 = vld [vmem:[#allocation7 + $0x90] sm:$0xff]
      %v70 = vld [vmem:[#allocation7 + $0x98] sm:$0xff]
      %v71 = vld [vmem:[#allocation7 + $0xa0] sm:$0xff]
      %v72 = vld [vmem:[#allocation7 + $0xa8] sm:$0xff]
      %v73 = vld [vmem:[#allocation7 + $0xb0] sm:$0xff]
      %v74 = vld [vmem:[#allocation7 + $0xb8] sm:$0xff]
      %v75 = vld [vmem:[#allocation7 + $0xc0] sm:$0xff]
      %v76 = vld [vmem:[#allocation7 + $0xc8] sm:$0xff]
      %v77 = vld [vmem:[#allocation7 + $0xd0] sm:$0xff]
      %v78 = vld [vmem:[#allocation7 + $0xd8] sm:$0xff]
      %v79 = vld [vmem:[#allocation7 + $0xe0] sm:$0xff]
      %v80 = vld [vmem:[#allocation7 + $0xe8] sm:$0xff]
      %v81 = vld [vmem:[#allocation7 + $0xf0] sm:$0xff]
      %v82 = vld [vmem:[#allocation7 + $0xf8] sm:$0xff]
      %v83 = vld [vmem:[#allocation7 + $0x100] sm:$0xff]
      %v84 = vld [vmem:[#allocation7 + $0x108] sm:$0xff]
      %v85 = vld [vmem:[#allocation7 + $0x110] sm:$0xff]
      %v86 = vld [vmem:[#allocation7 + $0x118] sm:$0xff]
      %v87 = vld [vmem:[#allocation7 + $0x120] sm:$0xff]
      %v88 = vld [vmem:[#allocation7 + $0x128] sm:$0xff]
      %v89 = vld [vmem:[#allocation7 + $0x130] sm:$0xff]
      %v90 = vld [vmem:[#allocation7 + $0x138] sm:$0xff]
      %v91 = vld [vmem:[#allocation7 + $0x140] sm:$0xff]
      %v92 = vld [vmem:[#allocation7 + $0x148] sm:$0xff]
      %v93 = vld [vmem:[#allocation7 + $0x150] sm:$0xff]
      %v94 = vld [vmem:[#allocation7 + $0x158] sm:$0xff]
      %v95 = vld [vmem:[#allocation7 + $0x160] sm:$0xff]
      %v96 = vld [vmem:[#allocation7 + $0x168] sm:$0xff]
      %v97 = vld [vmem:[#allocation7 + $0x170] sm:$0xff]
      %v98 = vld [vmem:[#allocation7 + $0x178] sm:$0xff]
      %v99 = vld [vmem:[#allocation7 + $0x180] sm:$0xff]
      %v100 = vld [vmem:[#allocation7 + $0x188] sm:$0xff]
      %v101 = vld [vmem:[#allocation7 + $0x190] sm:$0xff]
      %v102 = vld [vmem:[#allocation7 + $0x198] sm:$0xff]
      %v103 = vld [vmem:[#allocation7 + $0x1a0] sm:$0xff]
      %v104 = vld [vmem:[#allocation7 + $0x1a8] sm:$0xff]
      %v105 = vld [vmem:[#allocation7 + $0x1b0] sm:$0xff]
      %v106 = vld [vmem:[#allocation7 + $0x1b8] sm:$0xff]
      %v107 = vld [vmem:[#allocation7 + $0x1c0] sm:$0xff]
      %v108 = vld [vmem:[#allocation7 + $0x1c8] sm:$0xff]
      %v109 = vld [vmem:[#allocation7 + $0x1d0] sm:$0xff]
      %v110 = vld [vmem:[#allocation7 + $0x1d8] sm:$0xff]
      %v111 = vld [vmem:[#allocation7 + $0x1e0] sm:$0xff]
      %v112 = vld [vmem:[#allocation7 + $0x1e8] sm:$0xff]
      %v113 = vld [vmem:[#allocation7 + $0x1f0] sm:$0xff]
      %v114 = vld [vmem:[#allocation7 + $0x1f8] sm:$0xff]
      %v115 = vmul.f32 %v51, %v51
      %v116 = vmul.f32 %v52, %v52
      %v117 = vmul.f32 %v53, %v53
      %v118 = vmul.f32 %v54, %v54
      %v119 = vmul.f32 %v55, %v55
      %v120 = vmul.f32 %v56, %v56
      %v121 = vmul.f32 %v57, %v57
      %v122 = vmul.f32 %v58, %v58
      %v123 = vmul.f32 %v59, %v59
      %v124 = vmul.f32 %v60, %v60
      %v125 = vmul.f32 %v61, %v61
      %v126 = vmul.f32 %v62, %v62
      %v127 = vmul.f32 %v63, %v63
      %v128 = vmul.f32 %v64, %v64
      %v129 = vmul.f32 %v65, %v65
      %v130 = vmul.f32 %v66, %v66
      %v131 = vmul.f32 %v67, %v67
      %v132 = vmul.f32 %v68, %v68
      %v133 = vmul.f32 %v69, %v69
      %v134 = vmul.f32 %v70, %v70
      %v135 = vmul.f32 %v71, %v71
      %v136 = vmul.f32 %v72, %v72
      %v137 = vmul.f32 %v73, %v73
      %v138 = vmul.f32 %v74, %v74
      %v139 = vmul.f32 %v75, %v75
      %v140 = vmul.f32 %v76, %v76
      %v141 = vmul.f32 %v77, %v77
      %v142 = vmul.f32 %v78, %v78
      %v143 = vmul.f32 %v79, %v79
      %v144 = vmul.f32 %v80, %v80
      %v145 = vmul.f32 %v81, %v81
      %v146 = vmul.f32 %v82, %v82
      %v147 = vmul.f32 %v83, %v83
      %v148 = vmul.f32 %v84, %v84
      %v149 = vmul.f32 %v85, %v85
      %v150 = vmul.f32 %v86, %v86
      %v151 = vmul.f32 %v87, %v87
      %v152 = vmul.f32 %v88, %v88
      %v153 = vmul.f32 %v89, %v89
      %v154 = vmul.f32 %v90, %v90
      %v155 = vmul.f32 %v91, %v91
      %v156 = vmul.f32 %v92, %v92
      %v157 = vmul.f32 %v93, %v93
      %v158 = vmul.f32 %v94, %v94
      %v159 = vmul.f32 %v95, %v95
      %v160 = vmul.f32 %v96, %v96
      %v161 = vmul.f32 %v97, %v97
      %v162 = vmul.f32 %v98, %v98
      %v163 = vmul.f32 %v99, %v99
      %v164 = vmul.f32 %v100, %v100
      %v165 = vmul.f32 %v101, %v101
      %v166 = vmul.f32 %v102, %v102
      %v167 = vmul.f32 %v103, %v103
      %v168 = vmul.f32 %v104, %v104
      %v169 = vmul.f32 %v105, %v105
      %v170 = vmul.f32 %v106, %v106
      %v171 = vmul.f32 %v107, %v107
      %v172 = vmul.f32 %v108, %v108
      %v173 = vmul.f32 %v109, %v109
      %v174 = vmul.f32 %v110, %v110
      %v175 = vmul.f32 %v111, %v111
      %v176 = vmul.f32 %v112, %v112
      %v177 = vmul.f32 %v113, %v113
      %v178 = vmul.f32 %v114, %v114
      %v179 = vadd.f32 %v115, %v116
      %v180 = vadd.f32 %v179, %v117
      %v181 = vadd.f32 %v180, %v118
      %182 = vadd.xlane.f32.xlu0 %v181
      %v183 = vpop.xlane.xlu0 %182
      %v184 = vadd.f32 %v119, %v120
      %v185 = vadd.f32 %v184, %v121
      %v186 = vadd.f32 %v185, %v122
      %187 = vadd.xlane.f32.xlu0 %v186
      %v188 = vpop.xlane.xlu0 %187
      %v189 = vadd.f32 %v123, %v124
      %v190 = vadd.f32 %v189, %v125
      %v191 = vadd.f32 %v190, %v126
      %192 = vadd.xlane.f32.xlu0 %v191
      %v193 = vpop.xlane.xlu0 %192
      %v194 = vadd.f32 %v127, %v128
      %v195 = vadd.f32 %v194, %v129
      %v196 = vadd.f32 %v195, %v130
      %197 = vadd.xlane.f32.xlu0 %v196
      %v198 = vpop.xlane.xlu0 %197
      %v199 = vadd.f32 %v131, %v132
      %v200 = vadd.f32 %v199, %v133
      %v201 = vadd.f32 %v200, %v134
      %202 = vadd.xlane.f32.xlu0 %v201
      %v203 = vpop.xlane.xlu0 %202
      %v204 = vadd.f32 %v135, %v136
      %v205 = vadd.f32 %v204, %v137
      %v206 = vadd.f32 %v205, %v138
      %207 = vadd.xlane.f32.xlu0 %v206
      %v208 = vpop.xlane.xlu0 %207
      %v209 = vadd.f32 %v139, %v140
      %v210 = vadd.f32 %v209, %v141
      %v211 = vadd.f32 %v210, %v142
      %212 = vadd.xlane.f32.xlu0 %v211
      %v213 = vpop.xlane.xlu0 %212
      %v214 = vadd.f32 %v143, %v144
      %v215 = vadd.f32 %v214, %v145
      %v216 = vadd.f32 %v215, %v146
      %217 = vadd.xlane.f32.xlu0 %v216
      %v218 = vpop.xlane.xlu0 %217
      %v219 = vadd.f32 %v147, %v148
      %v220 = vadd.f32 %v219, %v149
      %v221 = vadd.f32 %v220, %v150
      %222 = vadd.xlane.f32.xlu0 %v221
      %v223 = vpop.xlane.xlu0 %222
      %v224 = vadd.f32 %v151, %v152
      %v225 = vadd.f32 %v224, %v153
      %v226 = vadd.f32 %v225, %v154
      %227 = vadd.xlane.f32.xlu0 %v226
      %v228 = vpop.xlane.xlu0 %227
      %v229 = vadd.f32 %v155, %v156
      %v230 = vadd.f32 %v229, %v157
      %v231 = vadd.f32 %v230, %v158
      %232 = vadd.xlane.f32.xlu0 %v231
      %v233 = vpop.xlane.xlu0 %232
      %v234 = vadd.f32 %v159, %v160
      %v235 = vadd.f32 %v234, %v161
      %v236 = vadd.f32 %v235, %v162
      %237 = vadd.xlane.f32.xlu0 %v236
      %v238 = vpop.xlane.xlu0 %237
      %v239 = vadd.f32 %v163, %v164
      %v240 = vadd.f32 %v239, %v165
      %v241 = vadd.f32 %v240, %v166
      %242 = vadd.xlane.f32.xlu0 %v241
      %v243 = vpop.xlane.xlu0 %242
      %v244 = vadd.f32 %v167, %v168
      %v245 = vadd.f32 %v244, %v169
      %v246 = vadd.f32 %v245, %v170
      %247 = vadd.xlane.f32.xlu0 %v246
      %v248 = vpop.xlane.xlu0 %247
      %v249 = vadd.f32 %v171, %v172
      %v250 = vadd.f32 %v249, %v173
      %v251 = vadd.f32 %v250, %v174
      %252 = vadd.xlane.f32.xlu0 %v251
      %v253 = vpop.xlane.xlu0 %252
      %v254 = vadd.f32 %v175, %v176
      %v255 = vadd.f32 %v254, %v177
      %v256 = vadd.f32 %v255, %v178
      %257 = vadd.xlane.f32.xlu0 %v256
      %v258 = vpop.xlane.xlu0 %257
      %vm259 = vcmp.gt.f32.partialorder %v183, 0.0
      %vm260 = vcmp.gt.f32.partialorder %v188, 0.0
      %vm261 = vcmp.gt.f32.partialorder %v193, 0.0
      %vm262 = vcmp.gt.f32.partialorder %v198, 0.0
      %vm263 = vcmp.gt.f32.partialorder %v203, 0.0
      %vm264 = vcmp.gt.f32.partialorder %v208, 0.0
      %vm265 = vcmp.gt.f32.partialorder %v213, 0.0
      %vm266 = vcmp.gt.f32.partialorder %v218, 0.0
      %vm267 = vcmp.gt.f32.partialorder %v223, 0.0
      %vm268 = vcmp.gt.f32.partialorder %v228, 0.0
      %vm269 = vcmp.gt.f32.partialorder %v233, 0.0
      %vm270 = vcmp.gt.f32.partialorder %v238, 0.0
      %vm271 = vcmp.gt.f32.partialorder %v243, 0.0
      %vm272 = vcmp.gt.f32.partialorder %v248, 0.0
      %vm273 = vcmp.gt.f32.partialorder %v253, 0.0
      %vm274 = vcmp.gt.f32.partialorder %v258, 0.0
      %v275 = vrsqrt.pop %v183
      %v276 = vrsqrt.pop %v188
      %v277 = vrsqrt.pop %v193
      %v278 = vrsqrt.pop %v198
      %v279 = vrsqrt.pop %v203
      %v280 = vrsqrt.pop %v208
      %v281 = vrsqrt.pop %v213
      %v282 = vrsqrt.pop %v218
      %v283 = vrsqrt.pop %v223
      %v284 = vrsqrt.pop %v228
      %v285 = vrsqrt.pop %v233
      %v286 = vrsqrt.pop %v238
      %v287 = vrsqrt.pop %v243
      %v288 = vrsqrt.pop %v248
      %v289 = vrsqrt.pop %v253
      %v290 = vrsqrt.pop %v258
      %v291 = vsel %vm259, %v275, 0.0
      %v292 = vsel %vm260, %v276, 0.0
      %v293 = vsel %vm261, %v277, 0.0
      %v294 = vsel %vm262, %v278, 0.0
      %v295 = vsel %vm263, %v279, 0.0
      %v296 = vsel %vm264, %v280, 0.0
      %v297 = vsel %vm265, %v281, 0.0
      %v298 = vsel %vm266, %v282, 0.0
      %v299 = vsel %vm267, %v283, 0.0
      %v300 = vsel %vm268, %v284, 0.0
      %v301 = vsel %vm269, %v285, 0.0
      %v302 = vsel %vm270, %v286, 0.0
      %v303 = vsel %vm271, %v287, 0.0
      %v304 = vsel %vm272, %v288, 0.0
      %v305 = vsel %vm273, %v289, 0.0
      %v306 = vsel %vm274, %v290, 0.0
      %v307 = vmul.f32 %v51, %v291
      %v308 = vmul.f32 %v52, %v291
      %v309 = vmul.f32 %v53, %v291
      %v310 = vmul.f32 %v54, %v291
      %v311 = vmul.f32 %v55, %v292
      %v312 = vmul.f32 %v56, %v292
      %v313 = vmul.f32 %v57, %v292
      %v314 = vmul.f32 %v58, %v292
      %v315 = vmul.f32 %v59, %v293
      %v316 = vmul.f32 %v60, %v293
      %v317 = vmul.f32 %v61, %v293
      %v318 = vmul.f32 %v62, %v293
      %v319 = vmul.f32 %v63, %v294
      %v320 = vmul.f32 %v64, %v294
      %v321 = vmul.f32 %v65, %v294
      %v322 = vmul.f32 %v66, %v294
      %v323 = vmul.f32 %v67, %v295
      %v324 = vmul.f32 %v68, %v295
      %v325 = vmul.f32 %v69, %v295
      %v326 = vmul.f32 %v70, %v295
      %v327 = vmul.f32 %v71, %v296
      %v328 = vmul.f32 %v72, %v296
      %v329 = vmul.f32 %v73, %v296
      %v330 = vmul.f32 %v74, %v296
      %v331 = vmul.f32 %v75, %v297
      %v332 = vmul.f32 %v76, %v297
      %v333 = vmul.f32 %v77, %v297
      %v334 = vmul.f32 %v78, %v297
      %v335 = vmul.f32 %v79, %v298
      %v336 = vmul.f32 %v80, %v298
      %v337 = vmul.f32 %v81, %v298
      %v338 = vmul.f32 %v82, %v298
      %v339 = vmul.f32 %v83, %v299
      %v340 = vmul.f32 %v84, %v299
      %v341 = vmul.f32 %v85, %v299
      %v342 = vmul.f32 %v86, %v299
      %v343 = vmul.f32 %v87, %v300
      %v344 = vmul.f32 %v88, %v300
      %v345 = vmul.f32 %v89, %v300
      %v346 = vmul.f32 %v90, %v300
      %v347 = vmul.f32 %v91, %v301
      %v348 = vmul.f32 %v92, %v301
      %v349 = vmul.f32 %v93, %v301
      %v350 = vmul.f32 %v94, %v301
      %v351 = vmul.f32 %v95, %v302
      %v352 = vmul.f32 %v96, %v302
      %v353 = vmul.f32 %v97, %v302
      %v354 = vmul.f32 %v98, %v302
      %v355 = vmul.f32 %v99, %v303
      %v356 = vmul.f32 %v100, %v303
      %v357 = vmul.f32 %v101, %v303
      %v358 = vmul.f32 %v102, %v303
      %v359 = vmul.f32 %v103, %v304
      %v360 = vmul.f32 %v104, %v304
      %v361 = vmul.f32 %v105, %v304
      %v362 = vmul.f32 %v106, %v304
      %v363 = vmul.f32 %v107, %v305
      %v364 = vmul.f32 %v108, %v305
      %v365 = vmul.f32 %v109, %v305
      %v366 = vmul.f32 %v110, %v305
      %v367 = vmul.f32 %v111, %v306
      %v368 = vmul.f32 %v112, %v306
      %v369 = vmul.f32 %v113, %v306
      %v370 = vmul.f32 %v114, %v306
      %371 = vst [vmem:[#allocation2] sm:$0xff] %v307
      %372 = vst [vmem:[#allocation2 + $0x8] sm:$0xff] %v308
      %373 = vst [vmem:[#allocation2 + $0x10] sm:$0xff] %v309
      %374 = vst [vmem:[#allocation2 + $0x18] sm:$0xff] %v310
      %375 = vst [vmem:[#allocation2 + $0x20] sm:$0xff] %v311
      %376 = vst [vmem:[#allocation2 + $0x28] sm:$0xff] %v312
      %377 = vst [vmem:[#allocation2 + $0x30] sm:$0xff] %v313
      %378 = vst [vmem:[#allocation2 + $0x38] sm:$0xff] %v314
      %379 = vst [vmem:[#allocation2 + $0x40] sm:$0xff] %v315
      %380 = vst [vmem:[#allocation2 + $0x48] sm:$0xff] %v316
      %381 = vst [vmem:[#allocation2 + $0x50] sm:$0xff] %v317
      %382 = vst [vmem:[#allocation2 + $0x58] sm:$0xff] %v318
      %383 = vst [vmem:[#allocation2 + $0x60] sm:$0xff] %v319
      %384 = vst [vmem:[#allocation2 + $0x68] sm:$0xff] %v320
      %385 = vst [vmem:[#allocation2 + $0x70] sm:$0xff] %v321
      %386 = vst [vmem:[#allocation2 + $0x78] sm:$0xff] %v322
      %387 = vst [vmem:[#allocation2 + $0x80] sm:$0xff] %v323
      %388 = vst [vmem:[#allocation2 + $0x88] sm:$0xff] %v324
      %389 = vst [vmem:[#allocation2 + $0x90] sm:$0xff] %v325
      %390 = vst [vmem:[#allocation2 + $0x98] sm:$0xff] %v326
      %391 = vst [vmem:[#allocation2 + $0xa0] sm:$0xff] %v327
      %392 = vst [vmem:[#allocation2 + $0xa8] sm:$0xff] %v328
      %393 = vst [vmem:[#allocation2 + $0xb0] sm:$0xff] %v329
      %394 = vst [vmem:[#allocation2 + $0xb8] sm:$0xff] %v330
      %395 = vst [vmem:[#allocation2 + $0xc0] sm:$0xff] %v331
      %396 = vst [vmem:[#allocation2 + $0xc8] sm:$0xff] %v332
      %397 = vst [vmem:[#allocation2 + $0xd0] sm:$0xff] %v333
      %398 = vst [vmem:[#allocation2 + $0xd8] sm:$0xff] %v334
      %399 = vst [vmem:[#allocation2 + $0xe0] sm:$0xff] %v335
      %400 = vst [vmem:[#allocation2 + $0xe8] sm:$0xff] %v336
      %401 = vst [vmem:[#allocation2 + $0xf0] sm:$0xff] %v337
      %402 = vst [vmem:[#allocation2 + $0xf8] sm:$0xff] %v338
      %403 = vst [vmem:[#allocation2 + $0x100] sm:$0xff] %v339
      %404 = vst [vmem:[#allocation2 + $0x108] sm:$0xff] %v340
      %405 = vst [vmem:[#allocation2 + $0x110] sm:$0xff] %v341
      %406 = vst [vmem:[#allocation2 + $0x118] sm:$0xff] %v342
      %407 = vst [vmem:[#allocation2 + $0x120] sm:$0xff] %v343
      %408 = vst [vmem:[#allocation2 + $0x128] sm:$0xff] %v344
      %409 = vst [vmem:[#allocation2 + $0x130] sm:$0xff] %v345
      %410 = vst [vmem:[#allocation2 + $0x138] sm:$0xff] %v346
      %411 = vst [vmem:[#allocation2 + $0x140] sm:$0xff] %v347
      %412 = vst [vmem:[#allocation2 + $0x148] sm:$0xff] %v348
      %413 = vst [vmem:[#allocation2 + $0x150] sm:$0xff] %v349
      %414 = vst [vmem:[#allocation2 + $0x158] sm:$0xff] %v350
      %415 = vst [vmem:[#allocation2 + $0x160] sm:$0xff] %v351
      %416 = vst [vmem:[#allocation2 + $0x168] sm:$0xff] %v352
      %417 = vst [vmem:[#allocation2 + $0x170] sm:$0xff] %v353
      %418 = vst [vmem:[#allocation2 + $0x178] sm:$0xff] %v354
      %419 = vst [vmem:[#allocation2 + $0x180] sm:$0xff] %v355
      %420 = vst [vmem:[#allocation2 + $0x188] sm:$0xff] %v356
      %421 = vst [vmem:[#allocation2 + $0x190] sm:$0xff] %v357
      %422 = vst [vmem:[#allocation2 + $0x198] sm:$0xff] %v358
      %423 = vst [vmem:[#allocation2 + $0x1a0] sm:$0xff] %v359
      %424 = vst [vmem:[#allocation2 + $0x1a8] sm:$0xff] %v360
      %425 = vst [vmem:[#allocation2 + $0x1b0] sm:$0xff] %v361
      %426 = vst [vmem:[#allocation2 + $0x1b8] sm:$0xff] %v362
      %427 = vst [vmem:[#allocation2 + $0x1c0] sm:$0xff] %v363
      %428 = vst [vmem:[#allocation2 + $0x1c8] sm:$0xff] %v364
      %429 = vst [vmem:[#allocation2 + $0x1d0] sm:$0xff] %v365
      %430 = vst [vmem:[#allocation2 + $0x1d8] sm:$0xff] %v366
      %431 = vst [vmem:[#allocation2 + $0x1e0] sm:$0xff] %v367
      %432 = vst [vmem:[#allocation2 + $0x1e8] sm:$0xff] %v368
      %433 = vst [vmem:[#allocation2 + $0x1f0] sm:$0xff] %v369
      %434 = vst [vmem:[#allocation2 + $0x1f8] sm:$0xff] %v370
    $region25: #{tpu_custom_call.1} parent=1 // pred_fallthru
      _
    %v435 = vld [vmem:[#allocation4] sm:$0xff]
    %v436 = vld [vmem:[#allocation4 + $0x8] sm:$0xff]
    %v437 = vld [vmem:[#allocation4 + $0x10] sm:$0xff]
    %v438 = vld [vmem:[#allocation4 + $0x18] sm:$0xff]
    %v439 = vld [vmem:[#allocation4 + $0x20] sm:$0xff]
    %v440 = vld [vmem:[#allocation4 + $0x28] sm:$0xff]
    %v441 = vld [vmem:[#allocation4 + $0x30] sm:$0xff]
    %v442 = vld [vmem:[#allocation4 + $0x38] sm:$0xff]
    %v443 = vld [vmem:[#allocation4 + $0x40] sm:$0xff]
    %v444 = vld [vmem:[#allocation4 + $0x48] sm:$0xff]
    %v445 = vld [vmem:[#allocation4 + $0x50] sm:$0xff]
    %v446 = vld [vmem:[#allocation4 + $0x58] sm:$0xff]
    %v447 = vld [vmem:[#allocation4 + $0x60] sm:$0xff]
    %v448 = vld [vmem:[#allocation4 + $0x68] sm:$0xff]
    %v449 = vld [vmem:[#allocation4 + $0x70] sm:$0xff]
    %v450 = vld [vmem:[#allocation4 + $0x78] sm:$0xff]
    %v451 = vld [vmem:[#allocation4 + $0x80] sm:$0xff]
    %v452 = vld [vmem:[#allocation4 + $0x88] sm:$0xff]
    %v453 = vld [vmem:[#allocation4 + $0x90] sm:$0xff]
    %v454 = vld [vmem:[#allocation4 + $0x98] sm:$0xff]
    %v455 = vld [vmem:[#allocation4 + $0xa0] sm:$0xff]
    %v456 = vld [vmem:[#allocation4 + $0xa8] sm:$0xff]
    %v457 = vld [vmem:[#allocation4 + $0xb0] sm:$0xff]
    %v458 = vld [vmem:[#allocation4 + $0xb8] sm:$0xff]
    %v459 = vld [vmem:[#allocation4 + $0xc0] sm:$0xff]
    %v460 = vld [vmem:[#allocation4 + $0xc8] sm:$0xff]
    %v461 = vld [vmem:[#allocation4 + $0xd0] sm:$0xff]
    %v462 = vld [vmem:[#allocation4 + $0xd8] sm:$0xff]
    %v463 = vld [vmem:[#allocation4 + $0xe0] sm:$0xff]
    %v464 = vld [vmem:[#allocation4 + $0xe8] sm:$0xff]
    %v465 = vld [vmem:[#allocation4 + $0xf0] sm:$0xff]
    %v466 = vld [vmem:[#allocation4 + $0xf8] sm:$0xff]
    %v467 = vld [vmem:[#allocation4 + $0x100] sm:$0xff]
    %v468 = vld [vmem:[#allocation4 + $0x108] sm:$0xff]
    %v469 = vld [vmem:[#allocation4 + $0x110] sm:$0xff]
    %v470 = vld [vmem:[#allocation4 + $0x118] sm:$0xff]
    %v471 = vld [vmem:[#allocation4 + $0x120] sm:$0xff]
    %v472 = vld [vmem:[#allocation4 + $0x128] sm:$0xff]
    %v473 = vld [vmem:[#allocation4 + $0x130] sm:$0xff]
    %v474 = vld [vmem:[#allocation4 + $0x138] sm:$0xff]
    %v475 = vld [vmem:[#allocation4 + $0x140] sm:$0xff]
    %v476 = vld [vmem:[#allocation4 + $0x148] sm:$0xff]
    %v477 = vld [vmem:[#allocation4 + $0x150] sm:$0xff]
    %v478 = vld [vmem:[#allocation4 + $0x158] sm:$0xff]
    %v479 = vld [vmem:[#allocation4 + $0x160] sm:$0xff]
    %v480 = vld [vmem:[#allocation4 + $0x168] sm:$0xff]
    %v481 = vld [vmem:[#allocation4 + $0x170] sm:$0xff]
    %v482 = vld [vmem:[#allocation4 + $0x178] sm:$0xff]
    %v483 = vld [vmem:[#allocation4 + $0x180] sm:$0xff]
    %v484 = vld [vmem:[#allocation4 + $0x188] sm:$0xff]
    %v485 = vld [vmem:[#allocation4 + $0x190] sm:$0xff]
    %v486 = vld [vmem:[#allocation4 + $0x198] sm:$0xff]
    %v487 = vld [vmem:[#allocation4 + $0x1a0] sm:$0xff]
    %v488 = vld [vmem:[#allocation4 + $0x1a8] sm:$0xff]
    %v489 = vld [vmem:[#allocation4 + $0x1b0] sm:$0xff]
    %v490 = vld [vmem:[#allocation4 + $0x1b8] sm:$0xff]
    %v491 = vld [vmem:[#allocation4 + $0x1c0] sm:$0xff]
    %v492 = vld [vmem:[#allocation4 + $0x1c8] sm:$0xff]
    %v493 = vld [vmem:[#allocation4 + $0x1d0] sm:$0xff]
    %v494 = vld [vmem:[#allocation4 + $0x1d8] sm:$0xff]
    %v495 = vld [vmem:[#allocation4 + $0x1e0] sm:$0xff]
    %v496 = vld [vmem:[#allocation4 + $0x1e8] sm:$0xff]
    %v497 = vld [vmem:[#allocation4 + $0x1f0] sm:$0xff]
    %v498 = vld [vmem:[#allocation4 + $0x1f8] sm:$0xff]
    %v499 = vmul.f32 %v435, %v435
    %v500 = vmul.f32 %v436, %v436
    %v501 = vmul.f32 %v437, %v437
    %v502 = vmul.f32 %v438, %v438
    %v503 = vmul.f32 %v439, %v439
    %v504 = vmul.f32 %v440, %v440
    %v505 = vmul.f32 %v441, %v441
    %v506 = vmul.f32 %v442, %v442
    %v507 = vmul.f32 %v443, %v443
    %v508 = vmul.f32 %v444, %v444
    %v509 = vmul.f32 %v445, %v445
    %v510 = vmul.f32 %v446, %v446
    %v511 = vmul.f32 %v447, %v447
    %v512 = vmul.f32 %v448, %v448
    %v513 = vmul.f32 %v449, %v449
    %v514 = vmul.f32 %v450, %v450
    %v515 = vmul.f32 %v451, %v451
    %v516 = vmul.f32 %v452, %v452
    %v517 = vmul.f32 %v453, %v453
    %v518 = vmul.f32 %v454, %v454
    %v519 = vmul.f32 %v455, %v455
    %v520 = vmul.f32 %v456, %v456
    %v521 = vmul.f32 %v457, %v457
    %v522 = vmul.f32 %v458, %v458
    %v523 = vmul.f32 %v459, %v459
    %v524 = vmul.f32 %v460, %v460
    %v525 = vmul.f32 %v461, %v461
    %v526 = vmul.f32 %v462, %v462
    %v527 = vmul.f32 %v463, %v463
    %v528 = vmul.f32 %v464, %v464
    %v529 = vmul.f32 %v465, %v465
    %v530 = vmul.f32 %v466, %v466
    %v531 = vmul.f32 %v467, %v467
    %v532 = vmul.f32 %v468, %v468
    %v533 = vmul.f32 %v469, %v469
    %v534 = vmul.f32 %v470, %v470
    %v535 = vmul.f32 %v471, %v471
    %v536 = vmul.f32 %v472, %v472
    %v537 = vmul.f32 %v473, %v473
    %v538 = vmul.f32 %v474, %v474
    %v539 = vmul.f32 %v475, %v475
    %v540 = vmul.f32 %v476, %v476
    %v541 = vmul.f32 %v477, %v477
    %v542 = vmul.f32 %v478, %v478
    %v543 = vmul.f32 %v479, %v479
    %v544 = vmul.f32 %v480, %v480
    %v545 = vmul.f32 %v481, %v481
    %v546 = vmul.f32 %v482, %v482
    %v547 = vmul.f32 %v483, %v483
    %v548 = vmul.f32 %v484, %v484
    %v549 = vmul.f32 %v485, %v485
    %v550 = vmul.f32 %v486, %v486
    %v551 = vmul.f32 %v487, %v487
    %v552 = vmul.f32 %v488, %v488
    %v553 = vmul.f32 %v489, %v489
    %v554 = vmul.f32 %v490, %v490
    %v555 = vmul.f32 %v491, %v491
    %v556 = vmul.f32 %v492, %v492
    %v557 = vmul.f32 %v493, %v493
    %v558 = vmul.f32 %v494, %v494
    %v559 = vmul.f32 %v495, %v495
    %v560 = vmul.f32 %v496, %v496
    %v561 = vmul.f32 %v497, %v497
    %v562 = vmul.f32 %v498, %v498
    %v563 = vadd.f32 %v499, %v500
    %v564 = vadd.f32 %v563, %v501
    %v565 = vadd.f32 %v564, %v502
    %566 = vadd.xlane.f32.xlu0 %v565
    %v567 = vpop.xlane.xlu0 %566
    %v568 = vadd.f32 %v503, %v504
    %v569 = vadd.f32 %v568, %v505
    %v570 = vadd.f32 %v569, %v506
    %571 = vadd.xlane.f32.xlu0 %v570
    %v572 = vpop.xlane.xlu0 %571
    %v573 = vadd.f32 %v507, %v508
    %v574 = vadd.f32 %v573, %v509
    %v575 = vadd.f32 %v574, %v510
    %576 = vadd.xlane.f32.xlu0 %v575
    %v577 = vpop.xlane.xlu0 %576
    %v578 = vadd.f32 %v511, %v512
    %v579 = vadd.f32 %v578, %v513
    %v580 = vadd.f32 %v579, %v514
    %581 = vadd.xlane.f32.xlu0 %v580
    %v582 = vpop.xlane.xlu0 %581
    %v583 = vadd.f32 %v515, %v516
    %v584 = vadd.f32 %v583, %v517
    %v585 = vadd.f32 %v584, %v518
    %586 = vadd.xlane.f32.xlu0 %v585
    %v587 = vpop.xlane.xlu0 %586
    %v588 = vadd.f32 %v519, %v520
    %v589 = vadd.f32 %v588, %v521
    %v590 = vadd.f32 %v589, %v522
    %591 = vadd.xlane.f32.xlu0 %v590
    %v592 = vpop.xlane.xlu0 %591
    %v593 = vadd.f32 %v523, %v524
    %v594 = vadd.f32 %v593, %v525
    %v595 = vadd.f32 %v594, %v526
    %596 = vadd.xlane.f32.xlu0 %v595
    %v597 = vpop.xlane.xlu0 %596
    %v598 = vadd.f32 %v527, %v528
    %v599 = vadd.f32 %v598, %v529
    %v600 = vadd.f32 %v599, %v530
    %601 = vadd.xlane.f32.xlu0 %v600
    %v602 = vpop.xlane.xlu0 %601
    %v603 = vadd.f32 %v531, %v532
    %v604 = vadd.f32 %v603, %v533
    %v605 = vadd.f32 %v604, %v534
    %606 = vadd.xlane.f32.xlu0 %v605
    %v607 = vpop.xlane.xlu0 %606
    %v608 = vadd.f32 %v535, %v536
    %v609 = vadd.f32 %v608, %v537
    %v610 = vadd.f32 %v609, %v538
    %611 = vadd.xlane.f32.xlu0 %v610
    %v612 = vpop.xlane.xlu0 %611
    %v613 = vadd.f32 %v539, %v540
    %v614 = vadd.f32 %v613, %v541
    %v615 = vadd.f32 %v614, %v542
    %616 = vadd.xlane.f32.xlu0 %v615
    %v617 = vpop.xlane.xlu0 %616
    %v618 = vadd.f32 %v543, %v544
    %v619 = vadd.f32 %v618, %v545
    %v620 = vadd.f32 %v619, %v546
    %621 = vadd.xlane.f32.xlu0 %v620
    %v622 = vpop.xlane.xlu0 %621
    %v623 = vadd.f32 %v547, %v548
    %v624 = vadd.f32 %v623, %v549
    %v625 = vadd.f32 %v624, %v550
    %626 = vadd.xlane.f32.xlu0 %v625
    %v627 = vpop.xlane.xlu0 %626
    %v628 = vadd.f32 %v551, %v552
    %v629 = vadd.f32 %v628, %v553
    %v630 = vadd.f32 %v629, %v554
    %631 = vadd.xlane.f32.xlu0 %v630
    %v632 = vpop.xlane.xlu0 %631
    %v633 = vadd.f32 %v555, %v556
    %v634 = vadd.f32 %v633, %v557
    %v635 = vadd.f32 %v634, %v558
    %636 = vadd.xlane.f32.xlu0 %v635
    %v637 = vpop.xlane.xlu0 %636
    %v638 = vadd.f32 %v559, %v560
    %v639 = vadd.f32 %v638, %v561
    %v640 = vadd.f32 %v639, %v562
    %641 = vadd.xlane.f32.xlu0 %v640
    %v642 = vpop.xlane.xlu0 %641
    %vm643 = vcmp.gt.f32.partialorder %v567, 0.0
    %vm644 = vcmp.gt.f32.partialorder %v572, 0.0
    %vm645 = vcmp.gt.f32.partialorder %v577, 0.0
    %vm646 = vcmp.gt.f32.partialorder %v582, 0.0
    %vm647 = vcmp.gt.f32.partialorder %v587, 0.0
    %vm648 = vcmp.gt.f32.partialorder %v592, 0.0
    %vm649 = vcmp.gt.f32.partialorder %v597, 0.0
    %vm650 = vcmp.gt.f32.partialorder %v602, 0.0
    %vm651 = vcmp.gt.f32.partialorder %v607, 0.0
    %vm652 = vcmp.gt.f32.partialorder %v612, 0.0
    %vm653 = vcmp.gt.f32.partialorder %v617, 0.0
    %vm654 = vcmp.gt.f32.partialorder %v622, 0.0
    %vm655 = vcmp.gt.f32.partialorder %v627, 0.0
    %vm656 = vcmp.gt.f32.partialorder %v632, 0.0
    %vm657 = vcmp.gt.f32.partialorder %v637, 0.0
    %vm658 = vcmp.gt.f32.partialorder %v642, 0.0
    %v659 = vrsqrt.pop %v567
    %v660 = vrsqrt.pop %v572
    %v661 = vrsqrt.pop %v577
    %v662 = vrsqrt.pop %v582
    %v663 = vrsqrt.pop %v587
    %v664 = vrsqrt.pop %v592
    %v665 = vrsqrt.pop %v597
    %v666 = vrsqrt.pop %v602
    %v667 = vrsqrt.pop %v607
    %v668 = vrsqrt.pop %v612
    %v669 = vrsqrt.pop %v617
    %v670 = vrsqrt.pop %v622
    %v671 = vrsqrt.pop %v627
    %v672 = vrsqrt.pop %v632
    %v673 = vrsqrt.pop %v637
    %v674 = vrsqrt.pop %v642
    %v675 = vsel %vm643, %v659, 0.0
    %v676 = vsel %vm644, %v660, 0.0
    %v677 = vsel %vm645, %v661, 0.0
    %v678 = vsel %vm646, %v662, 0.0
    %v679 = vsel %vm647, %v663, 0.0
    %v680 = vsel %vm648, %v664, 0.0
    %v681 = vsel %vm649, %v665, 0.0
    %v682 = vsel %vm650, %v666, 0.0
    %v683 = vsel %vm651, %v667, 0.0
    %v684 = vsel %vm652, %v668, 0.0
    %v685 = vsel %vm653, %v669, 0.0
    %v686 = vsel %vm654, %v670, 0.0
    %v687 = vsel %vm655, %v671, 0.0
    %v688 = vsel %vm656, %v672, 0.0
    %v689 = vsel %vm657, %v673, 0.0
    %v690 = vsel %vm658, %v674, 0.0
    %s691 = sld [smem:[#allocation3]]
    %v692 = vstv %s691
    %v693 = vmul.f32 %v692, %v675
    %v694 = vmul.f32 %v692, %v676
    %v695 = vmul.f32 %v692, %v677
    %v696 = vmul.f32 %v692, %v678
    %v697 = vmul.f32 %v692, %v679
    %v698 = vmul.f32 %v692, %v680
    %v699 = vmul.f32 %v692, %v681
    %v700 = vmul.f32 %v692, %v682
    %v701 = vmul.f32 %v692, %v683
    %v702 = vmul.f32 %v692, %v684
    %v703 = vmul.f32 %v692, %v685
    %v704 = vmul.f32 %v692, %v686
    %v705 = vmul.f32 %v692, %v687
    %v706 = vmul.f32 %v692, %v688
    %v707 = vmul.f32 %v692, %v689
    %v708 = vmul.f32 %v692, %v690
    %v709 = vmul.f32 %v435, %v693
    %v710 = vmul.f32 %v436, %v693
    %v711 = vmul.f32 %v437, %v693
    %v712 = vmul.f32 %v438, %v693
    %v713 = vmul.f32 %v439, %v694
    %v714 = vmul.f32 %v440, %v694
    %v715 = vmul.f32 %v441, %v694
    %v716 = vmul.f32 %v442, %v694
    %v717 = vmul.f32 %v443, %v695
    %v718 = vmul.f32 %v444, %v695
    %v719 = vmul.f32 %v445, %v695
    %v720 = vmul.f32 %v446, %v695
    %v721 = vmul.f32 %v447, %v696
    %v722 = vmul.f32 %v448, %v696
    %v723 = vmul.f32 %v449, %v696
    %v724 = vmul.f32 %v450, %v696
    %v725 = vmul.f32 %v451, %v697
    %v726 = vmul.f32 %v452, %v697
    %v727 = vmul.f32 %v453, %v697
    %v728 = vmul.f32 %v454, %v697
    %v729 = vmul.f32 %v455, %v698
    %v730 = vmul.f32 %v456, %v698
    %v731 = vmul.f32 %v457, %v698
    %v732 = vmul.f32 %v458, %v698
    %v733 = vmul.f32 %v459, %v699
    %v734 = vmul.f32 %v460, %v699
    %v735 = vmul.f32 %v461, %v699
    %v736 = vmul.f32 %v462, %v699
    %v737 = vmul.f32 %v463, %v700
    %v738 = vmul.f32 %v464, %v700
    %v739 = vmul.f32 %v465, %v700
    %v740 = vmul.f32 %v466, %v700
    %v741 = vmul.f32 %v467, %v701
    %v742 = vmul.f32 %v468, %v701
    %v743 = vmul.f32 %v469, %v701
    %v744 = vmul.f32 %v470, %v701
    %v745 = vmul.f32 %v471, %v702
    %v746 = vmul.f32 %v472, %v702
    %v747 = vmul.f32 %v473, %v702
    %v748 = vmul.f32 %v474, %v702
    %v749 = vmul.f32 %v475, %v703
    %v750 = vmul.f32 %v476, %v703
    %v751 = vmul.f32 %v477, %v703
    %v752 = vmul.f32 %v478, %v703
    %v753 = vmul.f32 %v479, %v704
    %v754 = vmul.f32 %v480, %v704
    %v755 = vmul.f32 %v481, %v704
    %v756 = vmul.f32 %v482, %v704
    %v757 = vmul.f32 %v483, %v705
    %v758 = vmul.f32 %v484, %v705
    %v759 = vmul.f32 %v485, %v705
    %v760 = vmul.f32 %v486, %v705
    %v761 = vmul.f32 %v487, %v706
    %v762 = vmul.f32 %v488, %v706
    %v763 = vmul.f32 %v489, %v706
    %v764 = vmul.f32 %v490, %v706
    %v765 = vmul.f32 %v491, %v707
    %v766 = vmul.f32 %v492, %v707
    %v767 = vmul.f32 %v493, %v707
    %v768 = vmul.f32 %v494, %v707
    %v769 = vmul.f32 %v495, %v708
    %v770 = vmul.f32 %v496, %v708
    %v771 = vmul.f32 %v497, %v708
    %v772 = vmul.f32 %v498, %v708
    %v773 = vld [vmem:[#allocation2] sm:$0xff]
    %v774 = vld [vmem:[#allocation2 + $0x8] sm:$0xff]
    %v775 = vld [vmem:[#allocation2 + $0x10] sm:$0xff]
    %v776 = vld [vmem:[#allocation2 + $0x18] sm:$0xff]
    %v777 = vld [vmem:[#allocation2 + $0x20] sm:$0xff]
    %v778 = vld [vmem:[#allocation2 + $0x28] sm:$0xff]
    %v779 = vld [vmem:[#allocation2 + $0x30] sm:$0xff]
    %v780 = vld [vmem:[#allocation2 + $0x38] sm:$0xff]
    %v781 = vld [vmem:[#allocation2 + $0x40] sm:$0xff]
    %v782 = vld [vmem:[#allocation2 + $0x48] sm:$0xff]
    %v783 = vld [vmem:[#allocation2 + $0x50] sm:$0xff]
    %v784 = vld [vmem:[#allocation2 + $0x58] sm:$0xff]
    %v785 = vld [vmem:[#allocation2 + $0x60] sm:$0xff]
    %v786 = vld [vmem:[#allocation2 + $0x68] sm:$0xff]
    %v787 = vld [vmem:[#allocation2 + $0x70] sm:$0xff]
    %v788 = vld [vmem:[#allocation2 + $0x78] sm:$0xff]
    %v789 = vld [vmem:[#allocation2 + $0x80] sm:$0xff]
    %v790 = vld [vmem:[#allocation2 + $0x88] sm:$0xff]
    %v791 = vld [vmem:[#allocation2 + $0x90] sm:$0xff]
    %v792 = vld [vmem:[#allocation2 + $0x98] sm:$0xff]
    %v793 = vld [vmem:[#allocation2 + $0xa0] sm:$0xff]
    %v794 = vld [vmem:[#allocation2 + $0xa8] sm:$0xff]
    %v795 = vld [vmem:[#allocation2 + $0xb0] sm:$0xff]
    %v796 = vld [vmem:[#allocation2 + $0xb8] sm:$0xff]
    %v797 = vld [vmem:[#allocation2 + $0xc0] sm:$0xff]
    %v798 = vld [vmem:[#allocation2 + $0xc8] sm:$0xff]
    %v799 = vld [vmem:[#allocation2 + $0xd0] sm:$0xff]
    %v800 = vld [vmem:[#allocation2 + $0xd8] sm:$0xff]
    %v801 = vld [vmem:[#allocation2 + $0xe0] sm:$0xff]
    %v802 = vld [vmem:[#allocation2 + $0xe8] sm:$0xff]
    %v803 = vld [vmem:[#allocation2 + $0xf0] sm:$0xff]
    %v804 = vld [vmem:[#allocation2 + $0xf8] sm:$0xff]
    %v805 = vld [vmem:[#allocation2 + $0x100] sm:$0xff]
    %v806 = vld [vmem:[#allocation2 + $0x108] sm:$0xff]
    %v807 = vld [vmem:[#allocation2 + $0x110] sm:$0xff]
    %v808 = vld [vmem:[#allocation2 + $0x118] sm:$0xff]
    %v809 = vld [vmem:[#allocation2 + $0x120] sm:$0xff]
    %v810 = vld [vmem:[#allocation2 + $0x128] sm:$0xff]
    %v811 = vld [vmem:[#allocation2 + $0x130] sm:$0xff]
    %v812 = vld [vmem:[#allocation2 + $0x138] sm:$0xff]
    %v813 = vld [vmem:[#allocation2 + $0x140] sm:$0xff]
    %v814 = vld [vmem:[#allocation2 + $0x148] sm:$0xff]
    %v815 = vld [vmem:[#allocation2 + $0x150] sm:$0xff]
    %v816 = vld [vmem:[#allocation2 + $0x158] sm:$0xff]
    %v817 = vld [vmem:[#allocation2 + $0x160] sm:$0xff]
    %v818 = vld [vmem:[#allocation2 + $0x168] sm:$0xff]
    %v819 = vld [vmem:[#allocation2 + $0x170] sm:$0xff]
    %v820 = vld [vmem:[#allocation2 + $0x178] sm:$0xff]
    %v821 = vld [vmem:[#allocation2 + $0x180] sm:$0xff]
    %v822 = vld [vmem:[#allocation2 + $0x188] sm:$0xff]
    %v823 = vld [vmem:[#allocation2 + $0x190] sm:$0xff]
    %v824 = vld [vmem:[#allocation2 + $0x198] sm:$0xff]
    %v825 = vld [vmem:[#allocation2 + $0x1a0] sm:$0xff]
    %v826 = vld [vmem:[#allocation2 + $0x1a8] sm:$0xff]
    %v827 = vld [vmem:[#allocation2 + $0x1b0] sm:$0xff]
    %v828 = vld [vmem:[#allocation2 + $0x1b8] sm:$0xff]
    %v829 = vld [vmem:[#allocation2 + $0x1c0] sm:$0xff]
    %v830 = vld [vmem:[#allocation2 + $0x1c8] sm:$0xff]
    %v831 = vld [vmem:[#allocation2 + $0x1d0] sm:$0xff]
    %v832 = vld [vmem:[#allocation2 + $0x1d8] sm:$0xff]
    %v833 = vld [vmem:[#allocation2 + $0x1e0] sm:$0xff]
    %v834 = vld [vmem:[#allocation2 + $0x1e8] sm:$0xff]
    %v835 = vld [vmem:[#allocation2 + $0x1f0] sm:$0xff]
    %v836 = vld [vmem:[#allocation2 + $0x1f8] sm:$0xff]
    %837 = vmatprep.subr.mxu0 %v834
    %838 = vmatpush1.xpose.msra.mxu0 %v833
    %839 = vmatprep.subr.mxu0 %v830
    %840 = vmatpush1.xpose.msra.mxu0 %v829
    %841 = vmatprep.subr.mxu0 %v826
    %842 = vmatpush1.xpose.msra.mxu0 %v825
    %843 = vmatprep.subr.mxu0 %v822
    %844 = vmatpush1.xpose.msra.mxu0 %v821
    %845 = vmatprep.subr.mxu0 %v818
    %846 = vmatpush1.xpose.msra.mxu0 %v817
    %847 = vmatprep.subr.mxu0 %v814
    %848 = vmatpush1.xpose.msra.mxu0 %v813
    %849 = vmatprep.subr.mxu0 %v810
    %850 = vmatpush1.xpose.msra.mxu0 %v809
    %851 = vmatprep.subr.mxu0 %v806
    %852 = vmatpush1.xpose.msra.mxu0 %v805
    %853 = vmatprep.subr.mxu0 %v802
    %854 = vmatpush1.xpose.msra.mxu0 %v801
    %855 = vmatprep.subr.mxu0 %v798
    %856 = vmatpush1.xpose.msra.mxu0 %v797
    %857 = vmatprep.subr.mxu0 %v794
    %858 = vmatpush1.xpose.msra.mxu0 %v793
    %859 = vmatprep.subr.mxu0 %v790
    %860 = vmatpush1.xpose.msra.mxu0 %v789
    %861 = vmatprep.subr.mxu0 %v786
    %862 = vmatpush1.xpose.msra.mxu0 %v785
    %863 = vmatprep.subr.mxu0 %v782
    %864 = vmatpush1.xpose.msra.mxu0 %v781
    %865 = vmatprep.subr.mxu0 %v778
    %866 = vmatpush1.xpose.msra.mxu0 %v777
    %867 = vmatprep.subr.mxu0 %v774
    %868 = vmatpush1.xpose.msra.mxu0 %v773
    %869 = vmatprep.subr.mxu0 0.0
    %870 = vmatpush2.xpose.msra.mxu0 0.0
    %871 = vmatprep.subr.mxu0 0.0
    %872 = vmatpush2.xpose.msra.mxu0 0.0
    %873 = vmatprep.subr.mxu0 0.0
    %874 = vmatpush2.xpose.msra.mxu0 0.0
    %875 = vmatprep.subr.mxu0 0.0
    %876 = vmatpush2.xpose.msra.mxu0 0.0
    %877 = vmatprep.subr.mxu0 0.0
    %878 = vmatpush2.xpose.msra.mxu0 0.0
    %879 = vmatprep.subr.mxu0 0.0
    %880 = vmatpush2.xpose.msra.mxu0 0.0
    %881 = vmatprep.subr.mxu0 0.0
    %882 = vmatpush2.xpose.msra.mxu0 0.0
    %883 = vmatprep.subr.mxu0 0.0
    %884 = vmatpush2.xpose.msra.mxu0 0.0
    %885 = vmatprep.subr.mxu0 0.0
    %886 = vmatpush2.xpose.msra.mxu0 0.0
    %887 = vmatprep.subr.mxu0 0.0
    %888 = vmatpush2.xpose.msra.mxu0 0.0
    %889 = vmatprep.subr.mxu0 0.0
    %890 = vmatpush2.xpose.msra.mxu0 0.0
    %891 = vmatprep.subr.mxu0 0.0
    %892 = vmatpush2.xpose.msra.mxu0 0.0
    %893 = vmatprep.subr.mxu0 0.0
    %894 = vmatpush2.xpose.msra.mxu0 0.0
    %895 = vmatprep.subr.mxu0 0.0
    %896 = vmatpush2.xpose.msra.mxu0 0.0
    %897 = vmatprep.subr.mxu0 0.0
    %898 = vmatpush2.xpose.msra.mxu0 0.0
    %899 = vmatprep.subr.mxu0 0.0
    %900 = vmatpush2.xpose.msra.mxu0 0.0
    %901 = vmatprep.mubr.f32.mxu0 %v710
    %902 = vmatmul.mubr.f32.gmra.mxu0 %v709
    %v903 = vpop.f32.mrf.mxu0
    %v904 = vadd.f32 0.0, %v903
    %v905 = vpop.f32.mrf.mxu0
    %906 = vmatprep.mubr.f32.mxu0 %v714
    %907 = vmatmul.mubr.f32.gmra.mxu0 %v713
    %v908 = vpop.f32.mrf.mxu0
    %v909 = vadd.f32 0.0, %v908
    %v910 = vpop.f32.mrf.mxu0
    %911 = vmatprep.mubr.f32.mxu0 %v718
    %912 = vmatmul.mubr.f32.gmra.mxu0 %v717
    %v913 = vpop.f32.mrf.mxu0
    %v914 = vadd.f32 0.0, %v913
    %v915 = vpop.f32.mrf.mxu0
    %916 = vmatprep.mubr.f32.mxu0 %v722
    %917 = vmatmul.mubr.f32.gmra.mxu0 %v721
    %v918 = vpop.f32.mrf.mxu0
    %v919 = vadd.f32 0.0, %v918
    %v920 = vpop.f32.mrf.mxu0
    %921 = vmatprep.mubr.f32.mxu0 %v726
    %922 = vmatmul.mubr.f32.gmra.mxu0 %v725
    %v923 = vpop.f32.mrf.mxu0
    %v924 = vadd.f32 0.0, %v923
    %v925 = vpop.f32.mrf.mxu0
    %926 = vmatprep.mubr.f32.mxu0 %v730
    %927 = vmatmul.mubr.f32.gmra.mxu0 %v729
    %v928 = vpop.f32.mrf.mxu0
    %v929 = vadd.f32 0.0, %v928
    %v930 = vpop.f32.mrf.mxu0
    %931 = vmatprep.mubr.f32.mxu0 %v734
    %932 = vmatmul.mubr.f32.gmra.mxu0 %v733
    %v933 = vpop.f32.mrf.mxu0
    %v934 = vadd.f32 0.0, %v933
    %v935 = vpop.f32.mrf.mxu0
    %936 = vmatprep.mubr.f32.mxu0 %v738
    %937 = vmatmul.mubr.f32.gmra.mxu0 %v737
    %v938 = vpop.f32.mrf.mxu0
    %v939 = vadd.f32 0.0, %v938
    %v940 = vpop.f32.mrf.mxu0
    %941 = vmatprep.mubr.f32.mxu0 %v742
    %942 = vmatmul.mubr.f32.gmra.mxu0 %v741
    %v943 = vpop.f32.mrf.mxu0
    %v944 = vadd.f32 0.0, %v943
    %v945 = vpop.f32.mrf.mxu0
    %946 = vmatprep.mubr.f32.mxu0 %v746
    %947 = vmatmul.mubr.f32.gmra.mxu0 %v745
    %v948 = vpop.f32.mrf.mxu0
    %v949 = vadd.f32 0.0, %v948
    %v950 = vpop.f32.mrf.mxu0
    %951 = vmatprep.mubr.f32.mxu0 %v750
    %952 = vmatmul.mubr.f32.gmra.mxu0 %v749
    %v953 = vpop.f32.mrf.mxu0
    %v954 = vadd.f32 0.0, %v953
    %v955 = vpop.f32.mrf.mxu0
    %956 = vmatprep.mubr.f32.mxu0 %v754
    %957 = vmatmul.mubr.f32.gmra.mxu0 %v753
    %v958 = vpop.f32.mrf.mxu0
    %v959 = vadd.f32 0.0, %v958
    %v960 = vpop.f32.mrf.mxu0
    %961 = vmatprep.mubr.f32.mxu0 %v758
    %962 = vmatmul.mubr.f32.gmra.mxu0 %v757
    %v963 = vpop.f32.mrf.mxu0
    %v964 = vadd.f32 0.0, %v963
    %v965 = vpop.f32.mrf.mxu0
    %966 = vmatprep.mubr.f32.mxu0 %v762
    %967 = vmatmul.mubr.f32.gmra.mxu0 %v761
    %v968 = vpop.f32.mrf.mxu0
    %v969 = vadd.f32 0.0, %v968
    %v970 = vpop.f32.mrf.mxu0
    %971 = vmatprep.mubr.f32.mxu0 %v766
    %972 = vmatmul.mubr.f32.gmra.mxu0 %v765
    %v973 = vpop.f32.mrf.mxu0
    %v974 = vadd.f32 0.0, %v973
    %v975 = vpop.f32.mrf.mxu0
    %976 = vmatprep.mubr.f32.mxu0 %v770
    %977 = vmatmul.mubr.f32.gmra.mxu0 %v769
    %v978 = vpop.f32.mrf.mxu0
    %v979 = vadd.f32 0.0, %v978
    %v980 = vpop.f32.mrf.mxu0
    %981 = vdwg.mxu0
    %982 = vmatprep.subr.mxu0 %v836
    %983 = vmatpush1.xpose.msra.mxu0 %v835
    %984 = vmatprep.subr.mxu0 %v832
    %985 = vmatpush1.xpose.msra.mxu0 %v831
    %986 = vmatprep.subr.mxu0 %v828
    %987 = vmatpush1.xpose.msra.mxu0 %v827
    %988 = vmatprep.subr.mxu0 %v824
    %989 = vmatpush1.xpose.msra.mxu0 %v823
    %990 = vmatprep.subr.mxu0 %v820
    %991 = vmatpush1.xpose.msra.mxu0 %v819
    %992 = vmatprep.subr.mxu0 %v816
    %993 = vmatpush1.xpose.msra.mxu0 %v815
    %994 = vmatprep.subr.mxu0 %v812
    %995 = vmatpush1.xpose.msra.mxu0 %v811
    %996 = vmatprep.subr.mxu0 %v808
    %997 = vmatpush1.xpose.msra.mxu0 %v807
    %998 = vmatprep.subr.mxu0 %v804
    %999 = vmatpush1.xpose.msra.mxu0 %v803
    %1000 = vmatprep.subr.mxu0 %v800
    %1001 = vmatpush1.xpose.msra.mxu0 %v799
    %1002 = vmatprep.subr.mxu0 %v796
    %1003 = vmatpush1.xpose.msra.mxu0 %v795
    %1004 = vmatprep.subr.mxu0 %v792
    %1005 = vmatpush1.xpose.msra.mxu0 %v791
    %1006 = vmatprep.subr.mxu0 %v788
    %1007 = vmatpush1.xpose.msra.mxu0 %v787
    %1008 = vmatprep.subr.mxu0 %v784
    %1009 = vmatpush1.xpose.msra.mxu0 %v783
    %1010 = vmatprep.subr.mxu0 %v780
    %1011 = vmatpush1.xpose.msra.mxu0 %v779
    %1012 = vmatprep.subr.mxu0 %v776
    %1013 = vmatpush1.xpose.msra.mxu0 %v775
    %1014 = vmatprep.subr.mxu0 0.0
    %1015 = vmatpush2.xpose.msra.mxu0 0.0
    %1016 = vmatprep.subr.mxu0 0.0
    %1017 = vmatpush2.xpose.msra.mxu0 0.0
    %1018 = vmatprep.subr.mxu0 0.0
    %1019 = vmatpush2.xpose.msra.mxu0 0.0
    %1020 = vmatprep.subr.mxu0 0.0
    %1021 = vmatpush2.xpose.msra.mxu0 0.0
    %1022 = vmatprep.subr.mxu0 0.0
    %1023 = vmatpush2.xpose.msra.mxu0 0.0
    %1024 = vmatprep.subr.mxu0 0.0
    %1025 = vmatpush2.xpose.msra.mxu0 0.0
    %1026 = vmatprep.subr.mxu0 0.0
    %1027 = vmatpush2.xpose.msra.mxu0 0.0
    %1028 = vmatprep.subr.mxu0 0.0
    %1029 = vmatpush2.xpose.msra.mxu0 0.0
    %1030 = vmatprep.subr.mxu0 0.0
    %1031 = vmatpush2.xpose.msra.mxu0 0.0
    %1032 = vmatprep.subr.mxu0 0.0
    %1033 = vmatpush2.xpose.msra.mxu0 0.0
    %1034 = vmatprep.subr.mxu0 0.0
    %1035 = vmatpush2.xpose.msra.mxu0 0.0
    %1036 = vmatprep.subr.mxu0 0.0
    %1037 = vmatpush2.xpose.msra.mxu0 0.0
    %1038 = vmatprep.subr.mxu0 0.0
    %1039 = vmatpush2.xpose.msra.mxu0 0.0
    %1040 = vmatprep.subr.mxu0 0.0
    %1041 = vmatpush2.xpose.msra.mxu0 0.0
    %1042 = vmatprep.subr.mxu0 0.0
    %1043 = vmatpush2.xpose.msra.mxu0 0.0
    %1044 = vmatprep.subr.mxu0 0.0
    %1045 = vmatpush2.xpose.msra.mxu0 0.0
    %1046 = vmatprep.mubr.f32.mxu0 %v712
    %1047 = vmatmul.mubr.f32.gmra.mxu0 %v711
    %v1048 = vpop.f32.mrf.mxu0
    %v1049 = vadd.f32 %v904, %v1048
    %v1050 = vpop.f32.mrf.mxu0
    %1051 = vmatprep.mubr.f32.mxu0 %v716
    %1052 = vmatmul.mubr.f32.gmra.mxu0 %v715
    %v1053 = vpop.f32.mrf.mxu0
    %v1054 = vadd.f32 %v909, %v1053
    %v1055 = vpop.f32.mrf.mxu0
    %1056 = vmatprep.mubr.f32.mxu0 %v720
    %1057 = vmatmul.mubr.f32.gmra.mxu0 %v719
    %v1058 = vpop.f32.mrf.mxu0
    %v1059 = vadd.f32 %v914, %v1058
    %v1060 = vpop.f32.mrf.mxu0
    %1061 = vmatprep.mubr.f32.mxu0 %v724
    %1062 = vmatmul.mubr.f32.gmra.mxu0 %v723
    %v1063 = vpop.f32.mrf.mxu0
    %v1064 = vadd.f32 %v919, %v1063
    %v1065 = vpop.f32.mrf.mxu0
    %1066 = vmatprep.mubr.f32.mxu0 %v728
    %1067 = vmatmul.mubr.f32.gmra.mxu0 %v727
    %v1068 = vpop.f32.mrf.mxu0
    %v1069 = vadd.f32 %v924, %v1068
    %v1070 = vpop.f32.mrf.mxu0
    %1071 = vmatprep.mubr.f32.mxu0 %v732
    %1072 = vmatmul.mubr.f32.gmra.mxu0 %v731
    %v1073 = vpop.f32.mrf.mxu0
    %v1074 = vadd.f32 %v929, %v1073
    %v1075 = vpop.f32.mrf.mxu0
    %1076 = vmatprep.mubr.f32.mxu0 %v736
    %1077 = vmatmul.mubr.f32.gmra.mxu0 %v735
    %v1078 = vpop.f32.mrf.mxu0
    %v1079 = vadd.f32 %v934, %v1078
    %v1080 = vpop.f32.mrf.mxu0
    %1081 = vmatprep.mubr.f32.mxu0 %v740
    %1082 = vmatmul.mubr.f32.gmra.mxu0 %v739
    %v1083 = vpop.f32.mrf.mxu0
    %v1084 = vadd.f32 %v939, %v1083
    %v1085 = vpop.f32.mrf.mxu0
    %1086 = vmatprep.mubr.f32.mxu0 %v744
    %1087 = vmatmul.mubr.f32.gmra.mxu0 %v743
    %v1088 = vpop.f32.mrf.mxu0
    %v1089 = vadd.f32 %v944, %v1088
    %v1090 = vpop.f32.mrf.mxu0
    %1091 = vmatprep.mubr.f32.mxu0 %v748
    %1092 = vmatmul.mubr.f32.gmra.mxu0 %v747
    %v1093 = vpop.f32.mrf.mxu0
    %v1094 = vadd.f32 %v949, %v1093
    %v1095 = vpop.f32.mrf.mxu0
    %1096 = vmatprep.mubr.f32.mxu0 %v752
    %1097 = vmatmul.mubr.f32.gmra.mxu0 %v751
    %v1098 = vpop.f32.mrf.mxu0
    %v1099 = vadd.f32 %v954, %v1098
    %v1100 = vpop.f32.mrf.mxu0
    %1101 = vmatprep.mubr.f32.mxu0 %v756
    %1102 = vmatmul.mubr.f32.gmra.mxu0 %v755
    %v1103 = vpop.f32.mrf.mxu0
    %v1104 = vadd.f32 %v959, %v1103
    %v1105 = vpop.f32.mrf.mxu0
    %1106 = vmatprep.mubr.f32.mxu0 %v760
    %1107 = vmatmul.mubr.f32.gmra.mxu0 %v759
    %v1108 = vpop.f32.mrf.mxu0
    %v1109 = vadd.f32 %v964, %v1108
    %v1110 = vpop.f32.mrf.mxu0
    %1111 = vmatprep.mubr.f32.mxu0 %v764
    %1112 = vmatmul.mubr.f32.gmra.mxu0 %v763
    %v1113 = vpop.f32.mrf.mxu0
    %v1114 = vadd.f32 %v969, %v1113
    %v1115 = vpop.f32.mrf.mxu0
    %1116 = vmatprep.mubr.f32.mxu0 %v768
    %1117 = vmatmul.mubr.f32.gmra.mxu0 %v767
    %v1118 = vpop.f32.mrf.mxu0
    %v1119 = vadd.f32 %v974, %v1118
    %v1120 = vpop.f32.mrf.mxu0
    %1121 = vmatprep.mubr.f32.mxu0 %v772
    %1122 = vmatmul.mubr.f32.gmra.mxu0 %v771
    %v1123 = vpop.f32.mrf.mxu0
    %v1124 = vadd.f32 %v979, %v1123
    %v1125 = vpop.f32.mrf.mxu0
    %1126 = vdwg.mxu0
    %1127 = vst [vmem:[#allocation9] sm:$0xff] %v1049
    %1128 = vst [vmem:[#allocation9 + $0x8] sm:$0xff] %v1054
    %1129 = vst [vmem:[#allocation9 + $0x10] sm:$0xff] %v1059
    %1130 = vst [vmem:[#allocation9 + $0x18] sm:$0xff] %v1064
    %1131 = vst [vmem:[#allocation9 + $0x20] sm:$0xff] %v1069
    %1132 = vst [vmem:[#allocation9 + $0x28] sm:$0xff] %v1074
    %1133 = vst [vmem:[#allocation9 + $0x30] sm:$0xff] %v1079
    %1134 = vst [vmem:[#allocation9 + $0x38] sm:$0xff] %v1084
    %1135 = vst [vmem:[#allocation9 + $0x40] sm:$0xff] %v1089
    %1136 = vst [vmem:[#allocation9 + $0x48] sm:$0xff] %v1094
    %1137 = vst [vmem:[#allocation9 + $0x50] sm:$0xff] %v1099
    %1138 = vst [vmem:[#allocation9 + $0x58] sm:$0xff] %v1104
    %1139 = vst [vmem:[#allocation9 + $0x60] sm:$0xff] %v1109
    %1140 = vst [vmem:[#allocation9 + $0x68] sm:$0xff] %v1114
    %1141 = vst [vmem:[#allocation9 + $0x70] sm:$0xff] %v1119
    %1142 = vst [vmem:[#allocation9 + $0x78] sm:$0xff] %v1124
    %1143 = vmatprep.subr.mxu0 %v770
    %1144 = vmatpush1.xpose.msra.mxu0 %v769
    %1145 = vmatprep.subr.mxu0 %v766
    %1146 = vmatpush1.xpose.msra.mxu0 %v765
    %1147 = vmatprep.subr.mxu0 %v762
    %1148 = vmatpush1.xpose.msra.mxu0 %v761
    %1149 = vmatprep.subr.mxu0 %v758
    %1150 = vmatpush1.xpose.msra.mxu0 %v757
    %1151 = vmatprep.subr.mxu0 %v754
    %1152 = vmatpush1.xpose.msra.mxu0 %v753
    %1153 = vmatprep.subr.mxu0 %v750
    %1154 = vmatpush1.xpose.msra.mxu0 %v749
    %1155 = vmatprep.subr.mxu0 %v746
    %1156 = vmatpush1.xpose.msra.mxu0 %v745
    %1157 = vmatprep.subr.mxu0 %v742
    %1158 = vmatpush1.xpose.msra.mxu0 %v741
    %1159 = vmatprep.subr.mxu0 %v738
    %1160 = vmatpush1.xpose.msra.mxu0 %v737
    %1161 = vmatprep.subr.mxu0 %v734
    %1162 = vmatpush1.xpose.msra.mxu0 %v733
    %1163 = vmatprep.subr.mxu0 %v730
    %1164 = vmatpush1.xpose.msra.mxu0 %v729
    %1165 = vmatprep.subr.mxu0 %v726
    %1166 = vmatpush1.xpose.msra.mxu0 %v725
    %1167 = vmatprep.subr.mxu0 %v722
    %1168 = vmatpush1.xpose.msra.mxu0 %v721
    %1169 = vmatprep.subr.mxu0 %v718
    %1170 = vmatpush1.xpose.msra.mxu0 %v717
    %1171 = vmatprep.subr.mxu0 %v714
    %1172 = vmatpush1.xpose.msra.mxu0 %v713
    %1173 = vmatprep.subr.mxu0 %v710
    %1174 = vmatpush1.xpose.msra.mxu0 %v709
    %1175 = vmatprep.subr.mxu0 0.0
    %1176 = vmatpush2.xpose.msra.mxu0 0.0
    %1177 = vmatprep.subr.mxu0 0.0
    %1178 = vmatpush2.xpose.msra.mxu0 0.0
    %1179 = vmatprep.subr.mxu0 0.0
    %1180 = vmatpush2.xpose.msra.mxu0 0.0
    %1181 = vmatprep.subr.mxu0 0.0
    %1182 = vmatpush2.xpose.msra.mxu0 0.0
    %1183 = vmatprep.subr.mxu0 0.0
    %1184 = vmatpush2.xpose.msra.mxu0 0.0
    %1185 = vmatprep.subr.mxu0 0.0
    %1186 = vmatpush2.xpose.msra.mxu0 0.0
    %1187 = vmatprep.subr.mxu0 0.0
    %1188 = vmatpush2.xpose.msra.mxu0 0.0
    %1189 = vmatprep.subr.mxu0 0.0
    %1190 = vmatpush2.xpose.msra.mxu0 0.0
    %1191 = vmatprep.subr.mxu0 0.0
    %1192 = vmatpush2.xpose.msra.mxu0 0.0
    %1193 = vmatprep.subr.mxu0 0.0
    %1194 = vmatpush2.xpose.msra.mxu0 0.0
    %1195 = vmatprep.subr.mxu0 0.0
    %1196 = vmatpush2.xpose.msra.mxu0 0.0
    %1197 = vmatprep.subr.mxu0 0.0
    %1198 = vmatpush2.xpose.msra.mxu0 0.0
    %1199 = vmatprep.subr.mxu0 0.0
    %1200 = vmatpush2.xpose.msra.mxu0 0.0
    %1201 = vmatprep.subr.mxu0 0.0
    %1202 = vmatpush2.xpose.msra.mxu0 0.0
    %1203 = vmatprep.subr.mxu0 0.0
    %1204 = vmatpush2.xpose.msra.mxu0 0.0
    %1205 = vmatprep.subr.mxu0 0.0
    %1206 = vmatpush2.xpose.msra.mxu0 0.0
    %1207 = vmatprep.mubr.f32.mxu0 %v774
    %1208 = vmatmul.mubr.f32.gmra.mxu0 %v773
    %v1209 = vpop.f32.mrf.mxu0
    %v1210 = vadd.f32 0.0, %v1209
    %v1211 = vpop.f32.mrf.mxu0
    %1212 = vmatprep.mubr.f32.mxu0 %v778
    %1213 = vmatmul.mubr.f32.gmra.mxu0 %v777
    %v1214 = vpop.f32.mrf.mxu0
    %v1215 = vadd.f32 0.0, %v1214
    %v1216 = vpop.f32.mrf.mxu0
    %1217 = vmatprep.mubr.f32.mxu0 %v782
    %1218 = vmatmul.mubr.f32.gmra.mxu0 %v781
    %v1219 = vpop.f32.mrf.mxu0
    %v1220 = vadd.f32 0.0, %v1219
    %v1221 = vpop.f32.mrf.mxu0
    %1222 = vmatprep.mubr.f32.mxu0 %v786
    %1223 = vmatmul.mubr.f32.gmra.mxu0 %v785
    %v1224 = vpop.f32.mrf.mxu0
    %v1225 = vadd.f32 0.0, %v1224
    %v1226 = vpop.f32.mrf.mxu0
    %1227 = vmatprep.mubr.f32.mxu0 %v790
    %1228 = vmatmul.mubr.f32.gmra.mxu0 %v789
    %v1229 = vpop.f32.mrf.mxu0
    %v1230 = vadd.f32 0.0, %v1229
    %v1231 = vpop.f32.mrf.mxu0
    %1232 = vmatprep.mubr.f32.mxu0 %v794
    %1233 = vmatmul.mubr.f32.gmra.mxu0 %v793
    %v1234 = vpop.f32.mrf.mxu0
    %v1235 = vadd.f32 0.0, %v1234
    %v1236 = vpop.f32.mrf.mxu0
    %1237 = vmatprep.mubr.f32.mxu0 %v798
    %1238 = vmatmul.mubr.f32.gmra.mxu0 %v797
    %v1239 = vpop.f32.mrf.mxu0
    %v1240 = vadd.f32 0.0, %v1239
    %v1241 = vpop.f32.mrf.mxu0
    %1242 = vmatprep.mubr.f32.mxu0 %v802
    %1243 = vmatmul.mubr.f32.gmra.mxu0 %v801
    %v1244 = vpop.f32.mrf.mxu0
    %v1245 = vadd.f32 0.0, %v1244
    %v1246 = vpop.f32.mrf.mxu0
    %1247 = vmatprep.mubr.f32.mxu0 %v806
    %1248 = vmatmul.mubr.f32.gmra.mxu0 %v805
    %v1249 = vpop.f32.mrf.mxu0
    %v1250 = vadd.f32 0.0, %v1249
    %v1251 = vpop.f32.mrf.mxu0
    %1252 = vmatprep.mubr.f32.mxu0 %v810
    %1253 = vmatmul.mubr.f32.gmra.mxu0 %v809
    %v1254 = vpop.f32.mrf.mxu0
    %v1255 = vadd.f32 0.0, %v1254
    %v1256 = vpop.f32.mrf.mxu0
    %1257 = vmatprep.mubr.f32.mxu0 %v814
    %1258 = vmatmul.mubr.f32.gmra.mxu0 %v813
    %v1259 = vpop.f32.mrf.mxu0
    %v1260 = vadd.f32 0.0, %v1259
    %v1261 = vpop.f32.mrf.mxu0
    %1262 = vmatprep.mubr.f32.mxu0 %v818
    %1263 = vmatmul.mubr.f32.gmra.mxu0 %v817
    %v1264 = vpop.f32.mrf.mxu0
    %v1265 = vadd.f32 0.0, %v1264
    %v1266 = vpop.f32.mrf.mxu0
    %1267 = vmatprep.mubr.f32.mxu0 %v822
    %1268 = vmatmul.mubr.f32.gmra.mxu0 %v821
    %v1269 = vpop.f32.mrf.mxu0
    %v1270 = vadd.f32 0.0, %v1269
    %v1271 = vpop.f32.mrf.mxu0
    %1272 = vmatprep.mubr.f32.mxu0 %v826
    %1273 = vmatmul.mubr.f32.gmra.mxu0 %v825
    %v1274 = vpop.f32.mrf.mxu0
    %v1275 = vadd.f32 0.0, %v1274
    %v1276 = vpop.f32.mrf.mxu0
    %1277 = vmatprep.mubr.f32.mxu0 %v830
    %1278 = vmatmul.mubr.f32.gmra.mxu0 %v829
    %v1279 = vpop.f32.mrf.mxu0
    %v1280 = vadd.f32 0.0, %v1279
    %v1281 = vpop.f32.mrf.mxu0
    %1282 = vmatprep.mubr.f32.mxu0 %v834
    %1283 = vmatmul.mubr.f32.gmra.mxu0 %v833
    %v1284 = vpop.f32.mrf.mxu0
    %v1285 = vadd.f32 0.0, %v1284
    %v1286 = vpop.f32.mrf.mxu0
    %1287 = vdwg.mxu0
    %1288 = vmatprep.subr.mxu0 %v772
    %1289 = vmatpush1.xpose.msra.mxu0 %v771
    %1290 = vmatprep.subr.mxu0 %v768
    %1291 = vmatpush1.xpose.msra.mxu0 %v767
    %1292 = vmatprep.subr.mxu0 %v764
    %1293 = vmatpush1.xpose.msra.mxu0 %v763
    %1294 = vmatprep.subr.mxu0 %v760
    %1295 = vmatpush1.xpose.msra.mxu0 %v759
    %1296 = vmatprep.subr.mxu0 %v756
    %1297 = vmatpush1.xpose.msra.mxu0 %v755
    %1298 = vmatprep.subr.mxu0 %v752
    %1299 = vmatpush1.xpose.msra.mxu0 %v751
    %1300 = vmatprep.subr.mxu0 %v748
    %1301 = vmatpush1.xpose.msra.mxu0 %v747
    %1302 = vmatprep.subr.mxu0 %v744
    %1303 = vmatpush1.xpose.msra.mxu0 %v743
    %1304 = vmatprep.subr.mxu0 %v740
    %1305 = vmatpush1.xpose.msra.mxu0 %v739
    %1306 = vmatprep.subr.mxu0 %v736
    %1307 = vmatpush1.xpose.msra.mxu0 %v735
    %1308 = vmatprep.subr.mxu0 %v732
    %1309 = vmatpush1.xpose.msra.mxu0 %v731
    %1310 = vmatprep.subr.mxu0 %v728
    %1311 = vmatpush1.xpose.msra.mxu0 %v727
    %1312 = vmatprep.subr.mxu0 %v724
    %1313 = vmatpush1.xpose.msra.mxu0 %v723
    %1314 = vmatprep.subr.mxu0 %v720
    %1315 = vmatpush1.xpose.msra.mxu0 %v719
    %1316 = vmatprep.subr.mxu0 %v716
    %1317 = vmatpush1.xpose.msra.mxu0 %v715
    %1318 = vmatprep.subr.mxu0 %v712
    %1319 = vmatpush1.xpose.msra.mxu0 %v711
    %1320 = vmatprep.subr.mxu0 0.0
    %1321 = vmatpush2.xpose.msra.mxu0 0.0
    %1322 = vmatprep.subr.mxu0 0.0
    %1323 = vmatpush2.xpose.msra.mxu0 0.0
    %1324 = vmatprep.subr.mxu0 0.0
    %1325 = vmatpush2.xpose.msra.mxu0 0.0
    %1326 = vmatprep.subr.mxu0 0.0
    %1327 = vmatpush2.xpose.msra.mxu0 0.0
    %1328 = vmatprep.subr.mxu0 0.0
    %1329 = vmatpush2.xpose.msra.mxu0 0.0
    %1330 = vmatprep.subr.mxu0 0.0
    %1331 = vmatpush2.xpose.msra.mxu0 0.0
    %1332 = vmatprep.subr.mxu0 0.0
    %1333 = vmatpush2.xpose.msra.mxu0 0.0
    %1334 = vmatprep.subr.mxu0 0.0
    %1335 = vmatpush2.xpose.msra.mxu0 0.0
    %1336 = vmatprep.subr.mxu0 0.0
    %1337 = vmatpush2.xpose.msra.mxu0 0.0
    %1338 = vmatprep.subr.mxu0 0.0
    %1339 = vmatpush2.xpose.msra.mxu0 0.0
    %1340 = vmatprep.subr.mxu0 0.0
    %1341 = vmatpush2.xpose.msra.mxu0 0.0
    %1342 = vmatprep.subr.mxu0 0.0
    %1343 = vmatpush2.xpose.msra.mxu0 0.0
    %1344 = vmatprep.subr.mxu0 0.0
    %1345 = vmatpush2.xpose.msra.mxu0 0.0
    %1346 = vmatprep.subr.mxu0 0.0
    %1347 = vmatpush2.xpose.msra.mxu0 0.0
    %1348 = vmatprep.subr.mxu0 0.0
    %1349 = vmatpush2.xpose.msra.mxu0 0.0
    %1350 = vmatprep.subr.mxu0 0.0
    %1351 = vmatpush2.xpose.msra.mxu0 0.0
    %1352 = vmatprep.mubr.f32.mxu0 %v776
    %1353 = vmatmul.mubr.f32.gmra.mxu0 %v775
    %v1354 = vpop.f32.mrf.mxu0
    %v1355 = vadd.f32 %v1210, %v1354
    %v1356 = vpop.f32.mrf.mxu0
    %1357 = vmatprep.mubr.f32.mxu0 %v780
    %1358 = vmatmul.mubr.f32.gmra.mxu0 %v779
    %v1359 = vpop.f32.mrf.mxu0
    %v1360 = vadd.f32 %v1215, %v1359
    %v1361 = vpop.f32.mrf.mxu0
    %1362 = vmatprep.mubr.f32.mxu0 %v784
    %1363 = vmatmul.mubr.f32.gmra.mxu0 %v783
    %v1364 = vpop.f32.mrf.mxu0
    %v1365 = vadd.f32 %v1220, %v1364
    %v1366 = vpop.f32.mrf.mxu0
    %1367 = vmatprep.mubr.f32.mxu0 %v788
    %1368 = vmatmul.mubr.f32.gmra.mxu0 %v787
    %v1369 = vpop.f32.mrf.mxu0
    %v1370 = vadd.f32 %v1225, %v1369
    %v1371 = vpop.f32.mrf.mxu0
    %1372 = vmatprep.mubr.f32.mxu0 %v792
    %1373 = vmatmul.mubr.f32.gmra.mxu0 %v791
    %v1374 = vpop.f32.mrf.mxu0
    %v1375 = vadd.f32 %v1230, %v1374
    %v1376 = vpop.f32.mrf.mxu0
    %1377 = vmatprep.mubr.f32.mxu0 %v796
    %1378 = vmatmul.mubr.f32.gmra.mxu0 %v795
    %v1379 = vpop.f32.mrf.mxu0
    %v1380 = vadd.f32 %v1235, %v1379
    %v1381 = vpop.f32.mrf.mxu0
    %1382 = vmatprep.mubr.f32.mxu0 %v800
    %1383 = vmatmul.mubr.f32.gmra.mxu0 %v799
    %v1384 = vpop.f32.mrf.mxu0
    %v1385 = vadd.f32 %v1240, %v1384
    %v1386 = vpop.f32.mrf.mxu0
    %1387 = vmatprep.mubr.f32.mxu0 %v804
    %1388 = vmatmul.mubr.f32.gmra.mxu0 %v803
    %v1389 = vpop.f32.mrf.mxu0
    %v1390 = vadd.f32 %v1245, %v1389
    %v1391 = vpop.f32.mrf.mxu0
    %1392 = vmatprep.mubr.f32.mxu0 %v808
    %1393 = vmatmul.mubr.f32.gmra.mxu0 %v807
    %v1394 = vpop.f32.mrf.mxu0
    %v1395 = vadd.f32 %v1250, %v1394
    %v1396 = vpop.f32.mrf.mxu0
    %1397 = vmatprep.mubr.f32.mxu0 %v812
    %1398 = vmatmul.mubr.f32.gmra.mxu0 %v811
    %v1399 = vpop.f32.mrf.mxu0
    %v1400 = vadd.f32 %v1255, %v1399
    %v1401 = vpop.f32.mrf.mxu0
    %1402 = vmatprep.mubr.f32.mxu0 %v816
    %1403 = vmatmul.mubr.f32.gmra.mxu0 %v815
    %v1404 = vpop.f32.mrf.mxu0
    %v1405 = vadd.f32 %v1260, %v1404
    %v1406 = vpop.f32.mrf.mxu0
    %1407 = vmatprep.mubr.f32.mxu0 %v820
    %1408 = vmatmul.mubr.f32.gmra.mxu0 %v819
    %v1409 = vpop.f32.mrf.mxu0
    %v1410 = vadd.f32 %v1265, %v1409
    %v1411 = vpop.f32.mrf.mxu0
    %1412 = vmatprep.mubr.f32.mxu0 %v824
    %1413 = vmatmul.mubr.f32.gmra.mxu0 %v823
    %v1414 = vpop.f32.mrf.mxu0
    %v1415 = vadd.f32 %v1270, %v1414
    %v1416 = vpop.f32.mrf.mxu0
    %1417 = vmatprep.mubr.f32.mxu0 %v828
    %1418 = vmatmul.mubr.f32.gmra.mxu0 %v827
    %v1419 = vpop.f32.mrf.mxu0
    %v1420 = vadd.f32 %v1275, %v1419
    %v1421 = vpop.f32.mrf.mxu0
    %1422 = vmatprep.mubr.f32.mxu0 %v832
    %1423 = vmatmul.mubr.f32.gmra.mxu0 %v831
    %v1424 = vpop.f32.mrf.mxu0
    %v1425 = vadd.f32 %v1280, %v1424
    %v1426 = vpop.f32.mrf.mxu0
    %1427 = vmatprep.mubr.f32.mxu0 %v836
    %1428 = vmatmul.mubr.f32.gmra.mxu0 %v835
    %v1429 = vpop.f32.mrf.mxu0
    %v1430 = vadd.f32 %v1285, %v1429
    %v1431 = vpop.f32.mrf.mxu0
    %1432 = vdwg.mxu0
    %1433 = vst [vmem:[#allocation10] sm:$0xff] %v1355
    %1434 = vst [vmem:[#allocation10 + $0x8] sm:$0xff] %v1360
    %1435 = vst [vmem:[#allocation10 + $0x10] sm:$0xff] %v1365
    %1436 = vst [vmem:[#allocation10 + $0x18] sm:$0xff] %v1370
    %1437 = vst [vmem:[#allocation10 + $0x20] sm:$0xff] %v1375
    %1438 = vst [vmem:[#allocation10 + $0x28] sm:$0xff] %v1380
    %1439 = vst [vmem:[#allocation10 + $0x30] sm:$0xff] %v1385
    %1440 = vst [vmem:[#allocation10 + $0x38] sm:$0xff] %v1390
    %1441 = vst [vmem:[#allocation10 + $0x40] sm:$0xff] %v1395
    %1442 = vst [vmem:[#allocation10 + $0x48] sm:$0xff] %v1400
    %1443 = vst [vmem:[#allocation10 + $0x50] sm:$0xff] %v1405
    %1444 = vst [vmem:[#allocation10 + $0x58] sm:$0xff] %v1410
    %1445 = vst [vmem:[#allocation10 + $0x60] sm:$0xff] %v1415
    %1446 = vst [vmem:[#allocation10 + $0x68] sm:$0xff] %v1420
    %1447 = vst [vmem:[#allocation10 + $0x70] sm:$0xff] %v1425
    %1448 = vst [vmem:[#allocation10 + $0x78] sm:$0xff] %v1430
    // Predicated region
    $region26: #{tpu_custom_call.1} parent=1 // pred_check
      _
    $region27: #{tpu_custom_call.1} parent=1 // pred_check_branch
      %1450 = sbr.rel (0) target = $region29
    $region28: #{tpu_custom_call.1} parent=1 // pred_region
      %s1452 = ssub.s32 2048, 2048
      %1453 = vsyncadd [#allocation6], %s1452
      %s1454 = sshll.u32 [#allocation9], 4
      %s1455 = int_to_ptr.vmem [resolvable:$true] %s1454
      %1460 = dma.vmem_to_hbm [thread:$0]  %s1455, 2048, %s3, [#allocation6], 128, 128, 8
    $region29: #{tpu_custom_call.1} parent=1 // pred_fallthru
      _
    // Predicated region
    $region30: #{tpu_custom_call.1} parent=1 // pred_check
      _
    $region31: #{tpu_custom_call.1} parent=1 // pred_check_branch
      %1462 = sbr.rel (0) target = $region33
    $region32: #{tpu_custom_call.1} parent=1 // pred_region
      %s1464 = ssub.s32 2048, 2048
      %1465 = vsyncadd [#allocation11], %s1464
      %s1466 = sshll.u32 [#allocation10], 4
      %s1467 = int_to_ptr.vmem [resolvable:$true] %s1466
      %1472 = dma.vmem_to_hbm [thread:$0]  %s1467, 2048, %s4, [#allocation11], 128, 128, 8
    $region33: #{tpu_custom_call.1} parent=1 // pred_fallthru
      _
    // Predicated region
    $region34: #{tpu_custom_call.1} parent=1 // pred_check
      _
    $region35: #{tpu_custom_call.1} parent=1 // pred_check_branch
      %1474 = sbr.rel (0) target = $region37
    $region36: #{tpu_custom_call.1} parent=1 // pred_region
      %1475 = dma.done [#allocation6], 2048
    $region37: #{tpu_custom_call.1} parent=1 // pred_fallthru
      _
    // Predicated region
    $region38: #{tpu_custom_call.1} parent=1 // pred_check
      _
    $region39: #{tpu_custom_call.1} parent=1 // pred_check_branch
      %1477 = sbr.rel (0) target = $region41
    $region40: #{tpu_custom_call.1} parent=1 // pred_region
      %1478 = dma.done [#allocation11], 2048
    $region41: #{tpu_custom_call.1} parent=1 // pred_fallthru
      _
    %1479 = vsyncpa [#allocation5], 1
    %1480 = vsyncpa [#allocation8], 1
    %1481 = vsyncpa [#allocation6], 1
    %1482 = vsyncpa [#allocation11], 1

</llo_original>
